<compile_context>
chip_gen: v7x
topology: tpu7x:2x2x1
jax: 0.10.0
libtpu: 0.0.40
codegen_flags: <defaults>
</compile_context>

<pallas_src>
import functools

import jax
import jax.numpy as jnp
import numpy as np
from jax import lax
from jax.experimental import pallas as pl
from jax.experimental.pallas import tpu as pltpu


def _round_up(n, m):
    return ((n + m - 1) // m) * m


# --------------------------------------------------------------------------
# Kernel: one RNN layer (1 or 2 directions fused), time chunked over the grid.
# Ref layout: per direction d: x_d, wih_d, whh_d, b_d (inputs), then out_d
# (outputs), then h_d scratches, then proj_d scratches.
# --------------------------------------------------------------------------
def _rnn_chunk_kernel(*refs, Tc, Bp, ndir, nonlinearity, unroll, need_mask, T, nt):
    ins = refs[: 4 * ndir]
    outs = refs[4 * ndir: 5 * ndir]
    h_refs = refs[5 * ndir: 6 * ndir]
    proj_refs = refs[6 * ndir: 7 * ndir]

    t = pl.program_id(0)

    @pl.when(t == 0)
    def _():
        for d in range(ndir):
            h_refs[d][...] = jnp.zeros_like(h_refs[d])   # h0 = zeros, as in the module

    # One lane-dense input projection per direction for the whole time chunk
    # (Tc*Bp rows -> fills the MXU), written to f32 VMEM scratch.
    for d in range(ndir):
        x_ref, wih_ref, _whh, b_ref = ins[4 * d: 4 * d + 4]
        proj_refs[d][...] = (
            jnp.dot(x_ref[...], wih_ref[...], preferred_element_type=jnp.float32)
            + b_ref[...])

    act = jnp.tanh if nonlinearity == "tanh" else (lambda v: jnp.maximum(v, 0.0))

    def step(k, carry):
        # d == 0: forward chain (in-chunk index k, chunk t)
        # d == 1: reverse chain (in-chunk index Tc-1-k, chunk nt-1-t)
        for d in range(ndir):
            whh_ref = ins[4 * d + 2]
            h_ref = h_refs[d]
            proj_ref = proj_refs[d]
            out_ref = outs[d]

            if d == 0:
                j = k
            else:
                j = Tc - 1 - k

            row = pl.multiple_of(j * Bp, 8)           # sublane-aligned slice
            h_prev = h_ref[...]                       # f32 carried state
            # Recurrent matmul reads W_hh straight from its VMEM ref each step
            # (avoids a large vreg-resident copy that would spill).
            rec = jnp.dot(h_prev.astype(whh_ref.dtype), whh_ref[...],
                          preferred_element_type=jnp.float32)
            pre = proj_ref[pl.ds(row, Bp), :] + rec
            ht = act(pre)

            if need_mask and d == 1:
                # Padded timesteps (time padded at the END) are visited FIRST
                # by the reverse chain -> freeze h there.
                t_glob = (nt - 1 - t) * Tc + j
                ht = jnp.where(t_glob < T, ht, h_prev)

            h_ref[...] = ht
            out_ref[j, :, :] = ht.astype(out_ref.dtype)
        return carry

    lax.fori_loop(0, Tc, step, 0, unroll=unroll)


# --------------------------------------------------------------------------
# Wrapper-side layout plumbing (free): pad / pre-transpose / fuse biases.
# --------------------------------------------------------------------------
def _pad_wih_t(w_ih, in_segments, Hp, dtype):
    """W_ih (H, sum_real) -> padded transpose (sum_padded, Hp), zero rows where
    the (padded) previous-layer activation has padding columns."""
    H = w_ih.shape[0]
    wt = w_ih.T
    pieces, off = [], 0
    for real, padded in in_segments:
        seg = wt[off:off + real]
        seg = jnp.pad(seg, ((0, padded - real), (0, Hp - H)))
        pieces.append(seg)
        off += real
    out = pieces[0] if len(pieces) == 1 else jnp.concatenate(pieces, axis=0)
    return out.astype(dtype)


def _rnn_layer(x2d, in_segments, layer_params, *, T, Tp, Tc, Bp, H, Hp,
               nonlinearity, mxu_dtype, bidirectional):
    """One layer (both directions fused if bidirectional).

    x2d: (Tp*Bp, Din) in mxu_dtype, padded layout described by in_segments.
    Returns a tuple of per-direction outputs, each (Tp, Bp, Hp) in mxu_dtype.
    """
    ndir = 2 if bidirectional else 1
    nt = Tp // Tc
    Din = x2d.shape[1]
    need_mask = bidirectional and (Tp != T)
    unroll = 8 if Tc % 8 == 0 else (4 if Tc % 4 == 0 else (2 if Tc % 2 == 0 else 1))

    dir_names = ("fwd", "rev")[:ndir]
    weights = []
    for name in dir_names:
        p = layer_params[name]
        wih_t = _pad_wih_t(p["w_ih"], in_segments, Hp, mxu_dtype)           # (Din, Hp)
        whh_t = jnp.pad(p["w_hh"].T, ((0, Hp - H), (0, Hp - H))).astype(mxu_dtype)
        bias = jnp.pad(p["b_ih"] + p["b_hh"], (0, Hp - H)).reshape(1, Hp)
        weights.append((wih_t, whh_t, bias.astype(jnp.float32)))

    fwd_x_map = lambda t: (t, 0)
    rev_x_map = lambda t, _nt=nt: (_nt - 1 - t, 0)
    fwd_o_map = lambda t: (t, 0, 0)
    rev_o_map = lambda t, _nt=nt: (_nt - 1 - t, 0, 0)
    const2 = lambda t: (0, 0)

    in_specs, args = [], []
    for d in range(ndir):
        xmap = fwd_x_map if d == 0 else rev_x_map
        in_specs += [
            pl.BlockSpec((Tc * Bp, Din), xmap),        # x chunk (pipelined)
            pl.BlockSpec((Din, Hp), const2),           # W_ih^T  (resident)
            pl.BlockSpec((Hp, Hp), const2),            # W_hh^T  (resident)
            pl.BlockSpec((1, Hp), const2),             # fused bias
        ]
        wih_t, whh_t, bias = weights[d]
        args += [x2d, wih_t, whh_t, bias]

    out_specs = [pl.BlockSpec((Tc, Bp, Hp), fwd_o_map)]
    out_shapes = [jax.ShapeDtypeStruct((Tp, Bp, Hp), mxu_dtype)]
    if ndir == 2:
        out_specs.append(pl.BlockSpec((Tc, Bp, Hp), rev_o_map))
        out_shapes.append(jax.ShapeDtypeStruct((Tp, Bp, Hp), mxu_dtype))

    scratch = ([pltpu.VMEM((Bp, Hp), jnp.float32)] * ndir        # carried h (f32)
               + [pltpu.VMEM((Tc * Bp, Hp), jnp.float32)] * ndir)  # chunk projection

    kernel = functools.partial(_rnn_chunk_kernel, Tc=Tc, Bp=Bp, ndir=ndir,
                               nonlinearity=nonlinearity, unroll=unroll,
                               need_mask=need_mask, T=T, nt=nt)

    # VMEM budget: double-buffered x/out chunks, resident weights counted 2x
    # (Pallas may still double-buffer constant-index blocks), plus scratch.
    item = jnp.dtype(mxu_dtype).itemsize
    need = ndir * (2 * Tc * Bp * Din * item
                   + 2 * Tc * Bp * Hp * item
                   + 2 * (Din * Hp + Hp * Hp) * item
                   + 2 * Hp * 4
                   + Bp * Hp * 4 + Tc * Bp * Hp * 4)
    try:
        phys = int(pltpu.get_tpu_info().vmem_capacity_bytes)
    except Exception:
        phys = 64 << 20                      # conservative (v7x-sized) fallback
    cap = int(phys * 0.6)                    # ~38 MiB on v7x, ~76 MiB on v5e/v6e
    vmem_limit = int(min(cap, max(32 << 20, int(1.25 * need))))

    outs = pl.pallas_call(
        kernel,
        out_shape=tuple(out_shapes),
        grid_spec=pltpu.PrefetchScalarGridSpec(
            num_scalar_prefetch=0,
            grid=(nt,),
            in_specs=in_specs,
            out_specs=out_specs,
            scratch_shapes=scratch,
        ),
        compiler_params=pltpu.CompilerParams(
            dimension_semantics=("arbitrary",),          # time is sequential
            vmem_limit_bytes=vmem_limit,
        ),
    )(*args)

    if not isinstance(outs, (tuple, list)):
        outs = (outs,)
    return tuple(outs)


# --------------------------------------------------------------------------
# Full RNN_cudnn forward: layer stack, padded activations between layers.
# --------------------------------------------------------------------------
def rnn_cudnn_forward(x, params, *, nonlinearity="tanh", bidirectional=False,
                      time_chunk=None, mxu_dtype=jnp.bfloat16):
    """x: (T, B, D) f32 (batch_first=False).  Returns (T, B, H * num_dirs) f32."""
    assert nonlinearity in ("tanh", "relu")
    T, B, D = x.shape
    H = params["layers"][0]["fwd"]["w_hh"].shape[0]
    ndir = 2 if bidirectional else 1
    Bp = _round_up(B, 8)                  # sublane granule
    Hp = _round_up(H, 128)                # lane granule -> unmasked vregs/stores

    if time_chunk is None:
        # Target Tc*Bp >= 256 MXU rows; never a tiny per-timestep grid step.
        time_chunk = min(64, _round_up(T, 8))
    Tc = max(1, int(time_chunk))
    Tp = _round_up(T, Tc)                 # pad time instead of shrinking Tc

    # Layer-0 input: pad time & batch once, cast to MXU dtype, flatten to 2-D.
    xp = jnp.pad(x, ((0, Tp - T), (0, Bp - B), (0, 0)))
    h2d = xp.reshape(Tp * Bp, D).astype(mxu_dtype)
    segs = ((D, D),)                      # layer-0 feature dim is unpadded

    num_layers = len(params["layers"])
    final = None
    for li, layer in enumerate(params["layers"]):
        outs = _rnn_layer(h2d, segs, layer, T=T, Tp=Tp, Tc=Tc, Bp=Bp, H=H, Hp=Hp,
                          nonlinearity=nonlinearity, mxu_dtype=mxu_dtype,
                          bidirectional=bidirectional)
        if li + 1 < num_layers:
            # Keep activations padded (Tp, Bp, ndir*Hp) and in the MXU dtype.
            nxt = outs[0] if ndir == 1 else jnp.concatenate(outs, axis=-1)
            h2d = nxt.reshape(Tp * Bp, ndir * Hp)
            segs = ((H, Hp),) * ndir
        else:
            if ndir == 1:
                final = outs[0][:T, :B, :H]
            else:
                final = jnp.concatenate([o[:T, :B, :H] for o in outs], axis=-1)
    return final.astype(jnp.float32)


# --------------------------------------------------------------------------
# Pure-JAX reference mirroring torch.nn.RNN for this forward.
# --------------------------------------------------------------------------
def rnn_ref(x, params, *, nonlinearity="tanh", bidirectional=False):
    act = jnp.tanh if nonlinearity == "tanh" else (lambda v: jnp.maximum(v, 0.0))

    def run_dir(inp, p, reverse):
        seq = jnp.flip(inp, 0) if reverse else inp
        T, B, _ = seq.shape
        H = p["w_hh"].shape[0]
        h = jnp.zeros((B, H), jnp.float32)
        outs = []
        for t in range(T):
            h = act(seq[t] @ p["w_ih"].T + p["b_ih"] + h @ p["w_hh"].T + p["b_hh"])
            outs.append(h)
        out = jnp.stack(outs)
        return jnp.flip(out, 0) if reverse else out

    h = x
    for layer in params["layers"]:
        fwd = run_dir(h, layer["fwd"], False)
        if bidirectional:
            h = jnp.concatenate([fwd, run_dir(h, layer["rev"], True)], axis=-1)
        else:
            h = fwd
    return h


def init_rnn_params(key, inp_dim, hidden_size, num_layers, bidirectional):
    """Deterministic params matching nn.RNN shapes: W_ih (H,D_l), W_hh (H,H), b (H,)."""
    dirs = 2 if bidirectional else 1
    s = 1.0 / np.sqrt(hidden_size)
    layers = []
    for l in range(num_layers):
        in_dim = inp_dim if l == 0 else hidden_size * dirs
        layer = {}
        for name in (("fwd", "rev") if bidirectional else ("fwd",)):
            key, k1, k2, k3, k4 = jax.random.split(key, 5)
            layer[name] = {
                "w_ih": jax.random.uniform(k1, (hidden_size, in_dim), jnp.float32, -s, s),
                "w_hh": jax.random.uniform(k2, (hidden_size, hidden_size), jnp.float32, -s, s),
                "b_ih": jax.random.uniform(k3, (hidden_size,), jnp.float32, -s, s),
                "b_hh": jax.random.uniform(k4, (hidden_size,), jnp.float32, -s, s),
            }
        layers.append(layer)
    return {"layers": layers}


if __name__ == "__main__":
    key = jax.random.PRNGKey(0)
    kx1, kx2, kp1, kp2, kp3 = jax.random.split(key, 5)

    # ---- Config 1: single layer, unidirectional, tanh, bf16 MXU path. ----
    T, B, D, H = 8, 4, 16, 32
    x = jax.random.normal(kx1, (T, B, D), jnp.float32)
    p1 = init_rnn_params(kp1, D, H, num_layers=1, bidirectional=False)
    out1 = rnn_cudnn_forward(x, p1, nonlinearity="tanh", bidirectional=False,
                             mxu_dtype=jnp.bfloat16)
    out1 = jax.block_until_ready(out1)
    ref1 = rnn_ref(x, p1, nonlinearity="tanh", bidirectional=False)
    assert out1.shape == (T, B, H)
    assert bool(jnp.all(jnp.isfinite(out1)))
    np.testing.assert_allclose(np.asarray(out1), np.asarray(ref1),
                               rtol=5e-2, atol=5e-2)

    # ---- Config 2: 2 layers, bidirectional, f32 MXU path (test-only tighter
    # check); time_chunk=16 > T exercises time padding + reverse-chain mask. ----
    p2 = init_rnn_params(kp2, D, H, num_layers=2, bidirectional=True)
    out2 = rnn_cudnn_forward(x, p2, nonlinearity="tanh", bidirectional=True,
                             time_chunk=16, mxu_dtype=jnp.float32)
    out2 = jax.block_until_ready(out2)
    ref2 = rnn_ref(x, p2, nonlinearity="tanh", bidirectional=True)
    assert out2.shape == (T, B, 2 * H)
    assert bool(jnp.all(jnp.isfinite(out2)))
    np.testing.assert_allclose(np.asarray(out2), np.asarray(ref2),
                               rtol=2e-2, atol=2e-2)

    # ---- Config 3: 2 layers, unidirectional, relu, bf16, non-multiple T
    # (exercises time padding + padded inter-layer handoff). ----
    T3 = 12
    x3 = jax.random.normal(kx2, (T3, B, D), jnp.float32)
    p3 = init_rnn_params(kp3, D, H, num_layers=2, bidirectional=False)
    out3 = rnn_cudnn_forward(x3, p3, nonlinearity="relu", bidirectional=False,
                             mxu_dtype=jnp.bfloat16)
    out3 = jax.block_until_ready(out3)
    ref3 = rnn_ref(x3, p3, nonlinearity="relu", bidirectional=False)
    assert out3.shape == (T3, B, H)
    assert bool(jnp.all(jnp.isfinite(out3)))
    np.testing.assert_allclose(np.asarray(out3), np.asarray(ref3),
                               rtol=5e-2, atol=5e-2)

    print("KERNEL_OK")
</pallas_src>

<mosaic_0001>
module attributes {stable_mosaic.version = 11 : i64} {
  func.func @_rnn_chunk_kernel(%arg0: i32, %arg1: memref<64x16xbf16, #tpu.memory_space<vmem>>, %arg2: memref<16x128xbf16, #tpu.memory_space<vmem>>, %arg3: memref<128x128xbf16, #tpu.memory_space<vmem>>, %arg4: memref<1x128xf32, #tpu.memory_space<vmem>>, %arg5: memref<8x8x128xbf16, #tpu.memory_space<vmem>>, %arg6: memref<8x128xf32, #tpu.memory_space<vmem>>, %arg7: memref<64x128xf32, #tpu.memory_space<vmem>>) attributes {dimension_semantics = [#tpu.dimension_semantics<arbitrary>], iteration_bounds = array<i64: 1>, scalar_prefetch = 0 : i64, scratch_operands = 2 : i64, tpu.core_type = #tpu.core_type<tc>, window_params = [{transform_indices = @transform_0, window_bounds = array<i64: 64, 16>}, {pipeline_mode = #tpu.pipeline_mode<synchronous>, transform_indices = @transform_1, window_bounds = array<i64: 16, 128>}, {pipeline_mode = #tpu.pipeline_mode<synchronous>, transform_indices = @transform_2, window_bounds = array<i64: 128, 128>}, {pipeline_mode = #tpu.pipeline_mode<synchronous>, transform_indices = @transform_3, window_bounds = array<i64: 1, 128>}, {transform_indices = @transform_4, window_bounds = array<i64: 8, 8, 128>}]} {
    %c0_i32 = arith.constant 0 : i32
    %0 = arith.cmpi eq, %arg0, %c0_i32 : i32
    %1 = arith.extui %0 : i1 to i32
    %c0_i32_0 = arith.constant 0 : i32
    %2 = arith.cmpi ne, %1, %c0_i32_0 : i32
    scf.if %2 {
      %cst_97 = arith.constant 0.000000e+00 : f32
      %138 = vector.broadcast %cst_97 : f32 to vector<8x128xf32>
      %c0_98 = arith.constant 0 : index
      %c0_99 = arith.constant 0 : index
      %139 = vector.load %arg6[%c0_98, %c0_99] : memref<8x128xf32, #tpu.memory_space<vmem>>, vector<8x128xf32>
      tpu.vector_store %arg6[%c0_98, %c0_99], %138 {strides = array<i32>} : memref<8x128xf32, #tpu.memory_space<vmem>>, vector<8x128xf32>,
    } else {
    }
    %c0 = arith.constant 0 : index
    %c0_1 = arith.constant 0 : index
    %3 = vector.load %arg1[%c0, %c0_1] : memref<64x16xbf16, #tpu.memory_space<vmem>>, vector<64x16xbf16>
    %c0_2 = arith.constant 0 : index
    %c0_3 = arith.constant 0 : index
    %4 = vector.load %arg2[%c0_2, %c0_3] : memref<16x128xbf16, #tpu.memory_space<vmem>>, vector<16x128xbf16>
    %cst = arith.constant dense<0.000000e+00> : vector<64x128xf32>
    %5 = tpu.matmul %3, %4, %cst {dimension_numbers = #tpu.dot_dimension_numbers<[1], [0], [0], [1], [0, 0, 1, 1], [], []>} : vector<64x16xbf16>, vector<16x128xbf16>, vector<64x128xf32> -> vector<64x128xf32>
    %c0_4 = arith.constant 0 : index
    %c0_5 = arith.constant 0 : index
    %6 = vector.load %arg4[%c0_4, %c0_5] : memref<1x128xf32, #tpu.memory_space<vmem>>, vector<1x128xf32>
    %7 = vector.broadcast %6 : vector<1x128xf32> to vector<64x128xf32>
    %8 = arith.addf %5, %7 : vector<64x128xf32>
    %c0_6 = arith.constant 0 : index
    %c0_7 = arith.constant 0 : index
    %9 = vector.load %arg7[%c0_6, %c0_7] : memref<64x128xf32, #tpu.memory_space<vmem>>, vector<64x128xf32>
    tpu.vector_store %arg7[%c0_6, %c0_7], %8 {strides = array<i32>} : memref<64x128xf32, #tpu.memory_space<vmem>>, vector<64x128xf32>,
    %c0_i32_8 = arith.constant 0 : i32
    %c8_i32 = arith.constant 8 : i32
    %10 = arith.muli %c0_i32_8, %c8_i32 : i32
    %11 = tpu.assume_multiple %10, 8 : i32
    %c0_9 = arith.constant 0 : index
    %c0_10 = arith.constant 0 : index
    %12 = vector.load %arg6[%c0_9, %c0_10] : memref<8x128xf32, #tpu.memory_space<vmem>>, vector<8x128xf32>
    %13 = arith.truncf %12 : vector<8x128xf32> to vector<8x128xbf16>
    %c0_11 = arith.constant 0 : index
    %c0_12 = arith.constant 0 : index
    %14 = vector.load %arg3[%c0_11, %c0_12] : memref<128x128xbf16, #tpu.memory_space<vmem>>, vector<128x128xbf16>
    %cst_13 = arith.constant dense<0.000000e+00> : vector<8x128xf32>
    %15 = tpu.matmul %13, %14, %cst_13 {dimension_numbers = #tpu.dot_dimension_numbers<[1], [0], [0], [1], [0, 0, 1, 1], [], []>} : vector<8x128xbf16>, vector<128x128xbf16>, vector<8x128xf32> -> vector<8x128xf32>
    %16 = arith.index_cast %11 : i32 to index
    %c0_14 = arith.constant 0 : index
    %17 = vector.load %arg7[%16, %c0_14] : memref<64x128xf32, #tpu.memory_space<vmem>>, vector<8x128xf32>
    %18 = arith.addf %17, %15 : vector<8x128xf32>
    %19 = math.tanh %18 : vector<8x128xf32>
    %c0_15 = arith.constant 0 : index
    %c0_16 = arith.constant 0 : index
    %20 = vector.load %arg6[%c0_15, %c0_16] : memref<8x128xf32, #tpu.memory_space<vmem>>, vector<8x128xf32>
    tpu.vector_store %arg6[%c0_15, %c0_16], %19 {strides = array<i32>} : memref<8x128xf32, #tpu.memory_space<vmem>>, vector<8x128xf32>,
    %21 = arith.truncf %19 : vector<8x128xf32> to vector<8x128xbf16>
    %22 = arith.index_cast %c0_i32_8 : i32 to index
    %c0_17 = arith.constant 0 : index
    %c0_18 = arith.constant 0 : index
    %23 = vector.load %arg5[%22, %c0_17, %c0_18] : memref<8x8x128xbf16, #tpu.memory_space<vmem>>, vector<1x8x128xbf16>
    %24 = vector.shape_cast %23 : vector<1x8x128xbf16> to vector<8x128xbf16>
    %25 = vector.shape_cast %21 : vector<8x128xbf16> to vector<1x8x128xbf16>
    tpu.vector_store %arg5[%22, %c0_17, %c0_18], %25 {strides = array<i32>} : memref<8x8x128xbf16, #tpu.memory_space<vmem>>, vector<1x8x128xbf16>,
    %c1_i32 = arith.constant 1 : i32
    %c8_i32_19 = arith.constant 8 : i32
    %26 = arith.muli %c1_i32, %c8_i32_19 : i32
    %27 = tpu.assume_multiple %26, 8 : i32
    %c0_20 = arith.constant 0 : index
    %c0_21 = arith.constant 0 : index
    %28 = vector.load %arg6[%c0_20, %c0_21] : memref<8x128xf32, #tpu.memory_space<vmem>>, vector<8x128xf32>
    %29 = arith.truncf %28 : vector<8x128xf32> to vector<8x128xbf16>
    %c0_22 = arith.constant 0 : index
    %c0_23 = arith.constant 0 : index
    %30 = vector.load %arg3[%c0_22, %c0_23] : memref<128x128xbf16, #tpu.memory_space<vmem>>, vector<128x128xbf16>
    %cst_24 = arith.constant dense<0.000000e+00> : vector<8x128xf32>
    %31 = tpu.matmul %29, %30, %cst_24 {dimension_numbers = #tpu.dot_dimension_numbers<[1], [0], [0], [1], [0, 0, 1, 1], [], []>} : vector<8x128xbf16>, vector<128x128xbf16>, vector<8x128xf32> -> vector<8x128xf32>
    %32 = arith.index_cast %27 : i32 to index
    %c0_25 = arith.constant 0 : index
    %33 = vector.load %arg7[%32, %c0_25] : memref<64x128xf32, #tpu.memory_space<vmem>>, vector<8x128xf32>
    %34 = arith.addf %33, %31 : vector<8x128xf32>
    %35 = math.tanh %34 : vector<8x128xf32>
    %c0_26 = arith.constant 0 : index
    %c0_27 = arith.constant 0 : index
    %36 = vector.load %arg6[%c0_26, %c0_27] : memref<8x128xf32, #tpu.memory_space<vmem>>, vector<8x128xf32>
    tpu.vector_store %arg6[%c0_26, %c0_27], %35 {strides = array<i32>} : memref<8x128xf32, #tpu.memory_space<vmem>>, vector<8x128xf32>,
    %37 = arith.truncf %35 : vector<8x128xf32> to vector<8x128xbf16>
    %38 = arith.index_cast %c1_i32 : i32 to index
    %c0_28 = arith.constant 0 : index
    %c0_29 = arith.constant 0 : index
    %39 = vector.load %arg5[%38, %c0_28, %c0_29] : memref<8x8x128xbf16, #tpu.memory_space<vmem>>, vector<1x8x128xbf16>
    %40 = vector.shape_cast %39 : vector<1x8x128xbf16> to vector<8x128xbf16>
    %41 = vector.shape_cast %37 : vector<8x128xbf16> to vector<1x8x128xbf16>
    tpu.vector_store %arg5[%38, %c0_28, %c0_29], %41 {strides = array<i32>} : memref<8x8x128xbf16, #tpu.memory_space<vmem>>, vector<1x8x128xbf16>,
    %c2_i32 = arith.constant 2 : i32
    %c8_i32_30 = arith.constant 8 : i32
    %42 = arith.muli %c2_i32, %c8_i32_30 : i32
    %43 = tpu.assume_multiple %42, 8 : i32
    %c0_31 = arith.constant 0 : index
    %c0_32 = arith.constant 0 : index
    %44 = vector.load %arg6[%c0_31, %c0_32] : memref<8x128xf32, #tpu.memory_space<vmem>>, vector<8x128xf32>
    %45 = arith.truncf %44 : vector<8x128xf32> to vector<8x128xbf16>
    %c0_33 = arith.constant 0 : index
    %c0_34 = arith.constant 0 : index
    %46 = vector.load %arg3[%c0_33, %c0_34] : memref<128x128xbf16, #tpu.memory_space<vmem>>, vector<128x128xbf16>
    %cst_35 = arith.constant dense<0.000000e+00> : vector<8x128xf32>
    %47 = tpu.matmul %45, %46, %cst_35 {dimension_numbers = #tpu.dot_dimension_numbers<[1], [0], [0], [1], [0, 0, 1, 1], [], []>} : vector<8x128xbf16>, vector<128x128xbf16>, vector<8x128xf32> -> vector<8x128xf32>
    %48 = arith.index_cast %43 : i32 to index
    %c0_36 = arith.constant 0 : index
    %49 = vector.load %arg7[%48, %c0_36] : memref<64x128xf32, #tpu.memory_space<vmem>>, vector<8x128xf32>
    %50 = arith.addf %49, %47 : vector<8x128xf32>
    %51 = math.tanh %50 : vector<8x128xf32>
    %c0_37 = arith.constant 0 : index
    %c0_38 = arith.constant 0 : index
    %52 = vector.load %arg6[%c0_37, %c0_38] : memref<8x128xf32, #tpu.memory_space<vmem>>, vector<8x128xf32>
    tpu.vector_store %arg6[%c0_37, %c0_38], %51 {strides = array<i32>} : memref<8x128xf32, #tpu.memory_space<vmem>>, vector<8x128xf32>,
    %53 = arith.truncf %51 : vector<8x128xf32> to vector<8x128xbf16>
    %54 = arith.index_cast %c2_i32 : i32 to index
    %c0_39 = arith.constant 0 : index
    %c0_40 = arith.constant 0 : index
    %55 = vector.load %arg5[%54, %c0_39, %c0_40] : memref<8x8x128xbf16, #tpu.memory_space<vmem>>, vector<1x8x128xbf16>
    %56 = vector.shape_cast %55 : vector<1x8x128xbf16> to vector<8x128xbf16>
    %57 = vector.shape_cast %53 : vector<8x128xbf16> to vector<1x8x128xbf16>
    tpu.vector_store %arg5[%54, %c0_39, %c0_40], %57 {strides = array<i32>} : memref<8x8x128xbf16, #tpu.memory_space<vmem>>, vector<1x8x128xbf16>,
    %c3_i32 = arith.constant 3 : i32
    %c8_i32_41 = arith.constant 8 : i32
    %58 = arith.muli %c3_i32, %c8_i32_41 : i32
    %59 = tpu.assume_multiple %58, 8 : i32
    %c0_42 = arith.constant 0 : index
    %c0_43 = arith.constant 0 : index
    %60 = vector.load %arg6[%c0_42, %c0_43] : memref<8x128xf32, #tpu.memory_space<vmem>>, vector<8x128xf32>
    %61 = arith.truncf %60 : vector<8x128xf32> to vector<8x128xbf16>
    %c0_44 = arith.constant 0 : index
    %c0_45 = arith.constant 0 : index
    %62 = vector.load %arg3[%c0_44, %c0_45] : memref<128x128xbf16, #tpu.memory_space<vmem>>, vector<128x128xbf16>
    %cst_46 = arith.constant dense<0.000000e+00> : vector<8x128xf32>
    %63 = tpu.matmul %61, %62, %cst_46 {dimension_numbers = #tpu.dot_dimension_numbers<[1], [0], [0], [1], [0, 0, 1, 1], [], []>} : vector<8x128xbf16>, vector<128x128xbf16>, vector<8x128xf32> -> vector<8x128xf32>
    %64 = arith.index_cast %59 : i32 to index
    %c0_47 = arith.constant 0 : index
    %65 = vector.load %arg7[%64, %c0_47] : memref<64x128xf32, #tpu.memory_space<vmem>>, vector<8x128xf32>
    %66 = arith.addf %65, %63 : vector<8x128xf32>
    %67 = math.tanh %66 : vector<8x128xf32>
    %c0_48 = arith.constant 0 : index
    %c0_49 = arith.constant 0 : index
    %68 = vector.load %arg6[%c0_48, %c0_49] : memref<8x128xf32, #tpu.memory_space<vmem>>, vector<8x128xf32>
    tpu.vector_store %arg6[%c0_48, %c0_49], %67 {strides = array<i32>} : memref<8x128xf32, #tpu.memory_space<vmem>>, vector<8x128xf32>,
    %69 = arith.truncf %67 : vector<8x128xf32> to vector<8x128xbf16>
    %70 = arith.index_cast %c3_i32 : i32 to index
    %c0_50 = arith.constant 0 : index
    %c0_51 = arith.constant 0 : index
    %71 = vector.load %arg5[%70, %c0_50, %c0_51] : memref<8x8x128xbf16, #tpu.memory_space<vmem>>, vector<1x8x128xbf16>
    %72 = vector.shape_cast %71 : vector<1x8x128xbf16> to vector<8x128xbf16>
    %73 = vector.shape_cast %69 : vector<8x128xbf16> to vector<1x8x128xbf16>
    tpu.vector_store %arg5[%70, %c0_50, %c0_51], %73 {strides = array<i32>} : memref<8x8x128xbf16, #tpu.memory_space<vmem>>, vector<1x8x128xbf16>,
    %c4_i32 = arith.constant 4 : i32
    %c8_i32_52 = arith.constant 8 : i32
    %74 = arith.muli %c4_i32, %c8_i32_52 : i32
    %75 = tpu.assume_multiple %74, 8 : i32
    %c0_53 = arith.constant 0 : index
    %c0_54 = arith.constant 0 : index
    %76 = vector.load %arg6[%c0_53, %c0_54] : memref<8x128xf32, #tpu.memory_space<vmem>>, vector<8x128xf32>
    %77 = arith.truncf %76 : vector<8x128xf32> to vector<8x128xbf16>
    %c0_55 = arith.constant 0 : index
    %c0_56 = arith.constant 0 : index
    %78 = vector.load %arg3[%c0_55, %c0_56] : memref<128x128xbf16, #tpu.memory_space<vmem>>, vector<128x128xbf16>
    %cst_57 = arith.constant dense<0.000000e+00> : vector<8x128xf32>
    %79 = tpu.matmul %77, %78, %cst_57 {dimension_numbers = #tpu.dot_dimension_numbers<[1], [0], [0], [1], [0, 0, 1, 1], [], []>} : vector<8x128xbf16>, vector<128x128xbf16>, vector<8x128xf32> -> vector<8x128xf32>
    %80 = arith.index_cast %75 : i32 to index
    %c0_58 = arith.constant 0 : index
    %81 = vector.load %arg7[%80, %c0_58] : memref<64x128xf32, #tpu.memory_space<vmem>>, vector<8x128xf32>
    %82 = arith.addf %81, %79 : vector<8x128xf32>
    %83 = math.tanh %82 : vector<8x128xf32>
    %c0_59 = arith.constant 0 : index
    %c0_60 = arith.constant 0 : index
    %84 = vector.load %arg6[%c0_59, %c0_60] : memref<8x128xf32, #tpu.memory_space<vmem>>, vector<8x128xf32>
    tpu.vector_store %arg6[%c0_59, %c0_60], %83 {strides = array<i32>} : memref<8x128xf32, #tpu.memory_space<vmem>>, vector<8x128xf32>,
    %85 = arith.truncf %83 : vector<8x128xf32> to vector<8x128xbf16>
    %86 = arith.index_cast %c4_i32 : i32 to index
    %c0_61 = arith.constant 0 : index
    %c0_62 = arith.constant 0 : index
    %87 = vector.load %arg5[%86, %c0_61, %c0_62] : memref<8x8x128xbf16, #tpu.memory_space<vmem>>, vector<1x8x128xbf16>
    %88 = vector.shape_cast %87 : vector<1x8x128xbf16> to vector<8x128xbf16>
    %89 = vector.shape_cast %85 : vector<8x128xbf16> to vector<1x8x128xbf16>
    tpu.vector_store %arg5[%86, %c0_61, %c0_62], %89 {strides = array<i32>} : memref<8x8x128xbf16, #tpu.memory_space<vmem>>, vector<1x8x128xbf16>,
    %c5_i32 = arith.constant 5 : i32
    %c8_i32_63 = arith.constant 8 : i32
    %90 = arith.muli %c5_i32, %c8_i32_63 : i32
    %91 = tpu.assume_multiple %90, 8 : i32
    %c0_64 = arith.constant 0 : index
    %c0_65 = arith.constant 0 : index
    %92 = vector.load %arg6[%c0_64, %c0_65] : memref<8x128xf32, #tpu.memory_space<vmem>>, vector<8x128xf32>
    %93 = arith.truncf %92 : vector<8x128xf32> to vector<8x128xbf16>
    %c0_66 = arith.constant 0 : index
    %c0_67 = arith.constant 0 : index
    %94 = vector.load %arg3[%c0_66, %c0_67] : memref<128x128xbf16, #tpu.memory_space<vmem>>, vector<128x128xbf16>
    %cst_68 = arith.constant dense<0.000000e+00> : vector<8x128xf32>
    %95 = tpu.matmul %93, %94, %cst_68 {dimension_numbers = #tpu.dot_dimension_numbers<[1], [0], [0], [1], [0, 0, 1, 1], [], []>} : vector<8x128xbf16>, vector<128x128xbf16>, vector<8x128xf32> -> vector<8x128xf32>
    %96 = arith.index_cast %91 : i32 to index
    %c0_69 = arith.constant 0 : index
    %97 = vector.load %arg7[%96, %c0_69] : memref<64x128xf32, #tpu.memory_space<vmem>>, vector<8x128xf32>
    %98 = arith.addf %97, %95 : vector<8x128xf32>
    %99 = math.tanh %98 : vector<8x128xf32>
    %c0_70 = arith.constant 0 : index
    %c0_71 = arith.constant 0 : index
    %100 = vector.load %arg6[%c0_70, %c0_71] : memref<8x128xf32, #tpu.memory_space<vmem>>, vector<8x128xf32>
    tpu.vector_store %arg6[%c0_70, %c0_71], %99 {strides = array<i32>} : memref<8x128xf32, #tpu.memory_space<vmem>>, vector<8x128xf32>,
    %101 = arith.truncf %99 : vector<8x128xf32> to vector<8x128xbf16>
    %102 = arith.index_cast %c5_i32 : i32 to index
    %c0_72 = arith.constant 0 : index
    %c0_73 = arith.constant 0 : index
    %103 = vector.load %arg5[%102, %c0_72, %c0_73] : memref<8x8x128xbf16, #tpu.memory_space<vmem>>, vector<1x8x128xbf16>
    %104 = vector.shape_cast %103 : vector<1x8x128xbf16> to vector<8x128xbf16>
    %105 = vector.shape_cast %101 : vector<8x128xbf16> to vector<1x8x128xbf16>
    tpu.vector_store %arg5[%102, %c0_72, %c0_73], %105 {strides = array<i32>} : memref<8x8x128xbf16, #tpu.memory_space<vmem>>, vector<1x8x128xbf16>,
    %c6_i32 = arith.constant 6 : i32
    %c8_i32_74 = arith.constant 8 : i32
    %106 = arith.muli %c6_i32, %c8_i32_74 : i32
    %107 = tpu.assume_multiple %106, 8 : i32
    %c0_75 = arith.constant 0 : index
    %c0_76 = arith.constant 0 : index
    %108 = vector.load %arg6[%c0_75, %c0_76] : memref<8x128xf32, #tpu.memory_space<vmem>>, vector<8x128xf32>
    %109 = arith.truncf %108 : vector<8x128xf32> to vector<8x128xbf16>
    %c0_77 = arith.constant 0 : index
    %c0_78 = arith.constant 0 : index
    %110 = vector.load %arg3[%c0_77, %c0_78] : memref<128x128xbf16, #tpu.memory_space<vmem>>, vector<128x128xbf16>
    %cst_79 = arith.constant dense<0.000000e+00> : vector<8x128xf32>
    %111 = tpu.matmul %109, %110, %cst_79 {dimension_numbers = #tpu.dot_dimension_numbers<[1], [0], [0], [1], [0, 0, 1, 1], [], []>} : vector<8x128xbf16>, vector<128x128xbf16>, vector<8x128xf32> -> vector<8x128xf32>
    %112 = arith.index_cast %107 : i32 to index
    %c0_80 = arith.constant 0 : index
    %113 = vector.load %arg7[%112, %c0_80] : memref<64x128xf32, #tpu.memory_space<vmem>>, vector<8x128xf32>
    %114 = arith.addf %113, %111 : vector<8x128xf32>
    %115 = math.tanh %114 : vector<8x128xf32>
    %c0_81 = arith.constant 0 : index
    %c0_82 = arith.constant 0 : index
    %116 = vector.load %arg6[%c0_81, %c0_82] : memref<8x128xf32, #tpu.memory_space<vmem>>, vector<8x128xf32>
    tpu.vector_store %arg6[%c0_81, %c0_82], %115 {strides = array<i32>} : memref<8x128xf32, #tpu.memory_space<vmem>>, vector<8x128xf32>,
    %117 = arith.truncf %115 : vector<8x128xf32> to vector<8x128xbf16>
    %118 = arith.index_cast %c6_i32 : i32 to index
    %c0_83 = arith.constant 0 : index
    %c0_84 = arith.constant 0 : index
    %119 = vector.load %arg5[%118, %c0_83, %c0_84] : memref<8x8x128xbf16, #tpu.memory_space<vmem>>, vector<1x8x128xbf16>
    %120 = vector.shape_cast %119 : vector<1x8x128xbf16> to vector<8x128xbf16>
    %121 = vector.shape_cast %117 : vector<8x128xbf16> to vector<1x8x128xbf16>
    tpu.vector_store %arg5[%118, %c0_83, %c0_84], %121 {strides = array<i32>} : memref<8x8x128xbf16, #tpu.memory_space<vmem>>, vector<1x8x128xbf16>,
    %c7_i32 = arith.constant 7 : i32
    %c8_i32_85 = arith.constant 8 : i32
    %122 = arith.muli %c7_i32, %c8_i32_85 : i32
    %123 = tpu.assume_multiple %122, 8 : i32
    %c0_86 = arith.constant 0 : index
    %c0_87 = arith.constant 0 : index
    %124 = vector.load %arg6[%c0_86, %c0_87] : memref<8x128xf32, #tpu.memory_space<vmem>>, vector<8x128xf32>
    %125 = arith.truncf %124 : vector<8x128xf32> to vector<8x128xbf16>
    %c0_88 = arith.constant 0 : index
    %c0_89 = arith.constant 0 : index
    %126 = vector.load %arg3[%c0_88, %c0_89] : memref<128x128xbf16, #tpu.memory_space<vmem>>, vector<128x128xbf16>
    %cst_90 = arith.constant dense<0.000000e+00> : vector<8x128xf32>
    %127 = tpu.matmul %125, %126, %cst_90 {dimension_numbers = #tpu.dot_dimension_numbers<[1], [0], [0], [1], [0, 0, 1, 1], [], []>} : vector<8x128xbf16>, vector<128x128xbf16>, vector<8x128xf32> -> vector<8x128xf32>
    %128 = arith.index_cast %123 : i32 to index
    %c0_91 = arith.constant 0 : index
    %129 = vector.load %arg7[%128, %c0_91] : memref<64x128xf32, #tpu.memory_space<vmem>>, vector<8x128xf32>
    %130 = arith.addf %129, %127 : vector<8x128xf32>
    %131 = math.tanh %130 : vector<8x128xf32>
    %c0_92 = arith.constant 0 : index
    %c0_93 = arith.constant 0 : index
    %132 = vector.load %arg6[%c0_92, %c0_93] : memref<8x128xf32, #tpu.memory_space<vmem>>, vector<8x128xf32>
    tpu.vector_store %arg6[%c0_92, %c0_93], %131 {strides = array<i32>} : memref<8x128xf32, #tpu.memory_space<vmem>>, vector<8x128xf32>,
    %133 = arith.truncf %131 : vector<8x128xf32> to vector<8x128xbf16>
    %134 = arith.index_cast %c7_i32 : i32 to index
    %c0_94 = arith.constant 0 : index
    %c0_95 = arith.constant 0 : index
    %135 = vector.load %arg5[%134, %c0_94, %c0_95] : memref<8x8x128xbf16, #tpu.memory_space<vmem>>, vector<1x8x128xbf16>
    %136 = vector.shape_cast %135 : vector<1x8x128xbf16> to vector<8x128xbf16>
    %137 = vector.shape_cast %133 : vector<8x128xbf16> to vector<1x8x128xbf16>
    tpu.vector_store %arg5[%134, %c0_94, %c0_95], %137 {strides = array<i32>} : memref<8x8x128xbf16, #tpu.memory_space<vmem>>, vector<1x8x128xbf16>,
    %c8_i32_96 = arith.constant 8 : i32
    return
  }
  func.func @transform_0(%arg0: i32) -> (i32, i32) {
    %c0_i32 = arith.constant 0 : i32
    %c0_i32_0 = arith.constant 0 : i32
    return %arg0, %c0_i32 : i32, i32
  }
  func.func @transform_1(%arg0: i32) -> (i32, i32) {
    %c0_i32 = arith.constant 0 : i32
    %c0_i32_0 = arith.constant 0 : i32
    %c0_i32_1 = arith.constant 0 : i32
    return %c0_i32, %c0_i32_0 : i32, i32
  }
  func.func @transform_2(%arg0: i32) -> (i32, i32) {
    %c0_i32 = arith.constant 0 : i32
    %c0_i32_0 = arith.constant 0 : i32
    %c0_i32_1 = arith.constant 0 : i32
    return %c0_i32, %c0_i32_0 : i32, i32
  }
  func.func @transform_3(%arg0: i32) -> (i32, i32) {
    %c0_i32 = arith.constant 0 : i32
    %c0_i32_0 = arith.constant 0 : i32
    %c0_i32_1 = arith.constant 0 : i32
    return %c0_i32, %c0_i32_0 : i32, i32
  }
  func.func @transform_4(%arg0: i32) -> (i32, i32, i32) {
    %c0_i32 = arith.constant 0 : i32
    %c0_i32_0 = arith.constant 0 : i32
    %c0_i32_1 = arith.constant 0 : i32
    return %arg0, %c0_i32, %c0_i32_0 : i32, i32, i32
  }
}

</mosaic_0001>

<llo_original>
// kernel: tpu_custom_call.1
$region0: #{tpu_custom_call.1}
  #allocation0 [shape = 'u32[]', space=smem, size = 0x4, offset = 0x4, fixed_abs, tag = 'smem constant byte address 0x4 - core index']
  #allocation1 [shape = 'u32[144,128]{1,0:T(1,128)}', space=vmem, size = 0x12000, scoped, tag = 'internal scratch']
  #allocation2 [shape = 'f32[8,128]{1,0:T(8,128)}', space=vmem, size = 0x1000, scoped, tag = 'scratch operand']
  #allocation3 [shape = 'f32[64,128]{1,0:T(8,128)}', space=vmem, size = 0x8000, scoped, tag = 'scratch operand']
  %s0 = inlined_call_operand.vmem [shape: bf16[64,16], index: 0, kind: input, shape index: {}]
  %s1 = inlined_call_operand.vmem [shape: bf16[16,128], index: 1, kind: input, shape index: {}]
  %s2 = inlined_call_operand.hbm [shape: bf16[128,128], index: 2, kind: input, shape index: {}]
  %s3 = inlined_call_operand.vmem [shape: f32[1,128], index: 3, kind: input, shape index: {}]
  %s4 = inlined_call_operand.hbm [shape: bf16[8,8,128], index: 4, kind: output, shape index: {}]
  %s5 = sld [smem:[#allocation0]]
  $region34: #{tpu_custom_call.1} parent=0
    _
  %s7 = ssub.s32 1, %s5
  %s8 = scalar_select 0, %s7, %s5
  $region1: #{tpu_custom_call.1} parent=0
    #allocation4 [shape = 'u8[32768]{0}', space=vmem, size = 0x8000, scoped, tag = 'input window, operand 2, single buffered']
    #allocation5 [shape = 's32[1]{0}', space=sflag, size = 0x4, scoped, tag = 'scoped memory for tpu_custom_call.1']
    #allocation6 [shape = 's32[1]{0}', space=sflag, size = 0x4, scoped, tag = 'scoped memory for tpu_custom_call.1']
    #allocation7 [shape = 'u8[16384]{0}', space=vmem, size = 0x4000, scoped, tag = 'output window, operand 0, single buffered']
    %9 = vsyncpa [#allocation5], 0
    %10 = vsyncpa [#allocation6], 0
    // Predicated region
    $region2: #{tpu_custom_call.1} parent=1 // pred_check
      _
    $region3: #{tpu_custom_call.1} parent=1 // pred_check_branch
      %12 = sbr.rel (0) target = $region5
    $region4: #{tpu_custom_call.1} parent=1 // pred_region
      _
    $region5: #{tpu_custom_call.1} parent=1 // pred_fallthru
      _
    // Predicated region
    $region6: #{tpu_custom_call.1} parent=1 // pred_check
      _
    $region7: #{tpu_custom_call.1} parent=1 // pred_check_branch
      %14 = sbr.rel (0) target = $region9
    $region8: #{tpu_custom_call.1} parent=1 // pred_region
      _
    $region9: #{tpu_custom_call.1} parent=1 // pred_fallthru
      _
    // Predicated region
    $region10: #{tpu_custom_call.1} parent=1 // pred_check
      _
    $region11: #{tpu_custom_call.1} parent=1 // pred_check_branch
      %16 = sbr.rel (0) target = $region13
    $region12: #{tpu_custom_call.1} parent=1 // pred_region
      %s18 = ssub.s32 1024, 1024
      %19 = vsyncadd [#allocation5], %s18
      %s20 = sshll.u32 [#allocation4], 4
      %s21 = int_to_ptr.vmem [resolvable:$true] %s20
      %26 = dma.hbm_to_vmem [thread:$0]  %s2, 1024, %s21, [#allocation5], 64, 64, 4
    $region13: #{tpu_custom_call.1} parent=1 // pred_fallthru
      _
    // Predicated region
    $region14: #{tpu_custom_call.1} parent=1 // pred_check
      _
    $region15: #{tpu_custom_call.1} parent=1 // pred_check_branch
      %28 = sbr.rel (0) target = $region17
    $region16: #{tpu_custom_call.1} parent=1 // pred_region
      _
    $region17: #{tpu_custom_call.1} parent=1 // pred_fallthru
      _
    // Predicated region
    $region18: #{tpu_custom_call.1} parent=1 // pred_check
      _
    $region19: #{tpu_custom_call.1} parent=1 // pred_check_branch
      %30 = sbr.rel (0) target = $region21
    $region20: #{tpu_custom_call.1} parent=1 // pred_region
      %31 = dma.done [#allocation5], 1024
    $region21: #{tpu_custom_call.1} parent=1 // pred_fallthru
      _
    %p33 = scmp.eq.s32.totalorder 0, 0
    // Predicated region
    $region22: #{tpu_custom_call.1} parent=1 // pred_check
      %p34 = pneg %p33
    $region23: #{tpu_custom_call.1} parent=1 // pred_check_branch
      %36 = sbr.rel (%p34) target = $region25
    $region24: #{tpu_custom_call.1} parent=1 // pred_region
      %37 = vst [vmem:[#allocation2] sm:$0xff] 0.0
    $region25: #{tpu_custom_call.1} parent=1 // pred_fallthru
      _
    %v38 = vld [vmem:[%s0] sm:$0xf]
    %v39 = vld [vmem:[%s0 + $0x4] sm:$0xf]
    %v40 = vld [vmem:[%s0 + $0x8] sm:$0xf]
    %v41 = vld [vmem:[%s0 + $0xc] sm:$0xf]
    %v42 = vld [vmem:[%s0 + $0x10] sm:$0xf]
    %v43 = vld [vmem:[%s0 + $0x14] sm:$0xf]
    %v44 = vld [vmem:[%s0 + $0x18] sm:$0xf]
    %v45 = vld [vmem:[%s0 + $0x1c] sm:$0xf]
    %v46 = vld [vmem:[%s1] sm:$0xf]
    %v47 = vld [vmem:[%s1 + $0x4] sm:$0xf]
    %v48 = vld [vmem:[%s3] sm:$0x1]
    %v50 = vlaneseq
    %v51 = vshrl.u32 %v50, 7
    %v52 = vsub.s32 0, %v51
    %v53 = vrot.slane %v48, %v52
    %v63 = vunpack.c.l.b16 %v38
    %v64 = vunpack.c.l.b16 %v39
    %v65 = vunpack.c.l.b16 %v40
    %v66 = vunpack.c.l.b16 %v41
    %v67 = vunpack.c.l.b16 %v42
    %v68 = vunpack.c.l.b16 %v43
    %v69 = vunpack.c.l.b16 %v44
    %v70 = vunpack.c.l.b16 %v45
    %v71 = vpack.c.b16 %v64, %v63
    %v72 = vpack.c.b16 %v66, %v65
    %v73 = vpack.c.b16 %v68, %v67
    %v74 = vpack.c.b16 %v70, %v69
    %v77 = vunpack.c.l.b16 %v46
    %v78 = vunpack.c.l.b16 %v47
    %v79 = vpack.c.b16 %v78, %v77
    %vm81 = vcmask 130048
    %v83 = vsel %vm81, %v71, 0
    %v86 = vsel %vm81, %v72, 0
    %v89 = vsel %vm81, %v73, 0
    %v92 = vsel %vm81, %v74, 0
    %94 = vmatprep.subr.bf16.mxu0 0
    %95 = vmatpush1.bf16.msra.mxu0 %v79
    %96 = vmatprep.subr.bf16.mxu0 0
    %97 = vmatpush1.bf16.msra.mxu0 0
    %98 = vmatprep.subr.bf16.mxu0 0
    %99 = vmatpush1.bf16.msra.mxu0 0
    %100 = vmatprep.subr.bf16.mxu0 0
    %101 = vmatpush1.bf16.msra.mxu0 0
    %102 = vmatprep.subr.bf16.mxu0 0
    %103 = vmatpush1.bf16.msra.mxu0 0
    %104 = vmatprep.subr.bf16.mxu0 0
    %105 = vmatpush1.bf16.msra.mxu0 0
    %106 = vmatprep.subr.bf16.mxu0 0
    %107 = vmatpush1.bf16.msra.mxu0 0
    %108 = vmatprep.subr.bf16.mxu0 0
    %109 = vmatpush1.bf16.msra.mxu0 0
    %110 = vmatprep.subr.bf16.mxu0 0
    %111 = vmatpush1.bf16.msra.mxu0 0
    %112 = vmatprep.subr.bf16.mxu0 0
    %113 = vmatpush1.bf16.msra.mxu0 0
    %114 = vmatprep.subr.bf16.mxu0 0
    %115 = vmatpush1.bf16.msra.mxu0 0
    %116 = vmatprep.subr.bf16.mxu0 0
    %117 = vmatpush1.bf16.msra.mxu0 0
    %118 = vmatprep.subr.bf16.mxu0 0
    %119 = vmatpush1.bf16.msra.mxu0 0
    %120 = vmatprep.subr.bf16.mxu0 0
    %121 = vmatpush1.bf16.msra.mxu0 0
    %122 = vmatprep.subr.bf16.mxu0 0
    %123 = vmatpush1.bf16.msra.mxu0 0
    %124 = vmatprep.subr.bf16.mxu0 0
    %125 = vmatpush1.bf16.msra.mxu0 0
    %126 = vmatprep.mubr.bf16.mxu0 0
    %127 = vmatmul.mubr.bf16.gmra.mrb[0].mxu0 %v83
    %v128 = vpop.f32.mrb[0].mxu0
    %v129 = vadd.f32 %v53, %v128
    %v130 = vpop.f32.mrb[0].mxu0
    %v131 = vpop.f32.mrb[0].mxu0
    %v132 = vadd.f32 %v53, %v131
    %v133 = vpop.f32.mrb[0].mxu0
    %134 = vmatprep.mubr.bf16.mxu0 0
    %135 = vmatmul.mubr.bf16.gmra.mrb[0].mxu0 %v86
    %v136 = vpop.f32.mrb[0].mxu0
    %v137 = vadd.f32 %v53, %v136
    %v138 = vpop.f32.mrb[0].mxu0
    %v139 = vpop.f32.mrb[0].mxu0
    %v140 = vadd.f32 %v53, %v139
    %v141 = vpop.f32.mrb[0].mxu0
    %142 = vmatprep.mubr.bf16.mxu0 0
    %143 = vmatmul.mubr.bf16.gmra.mrb[0].mxu0 %v89
    %v144 = vpop.f32.mrb[0].mxu0
    %v145 = vadd.f32 %v53, %v144
    %v146 = vpop.f32.mrb[0].mxu0
    %v147 = vpop.f32.mrb[0].mxu0
    %v148 = vadd.f32 %v53, %v147
    %v149 = vpop.f32.mrb[0].mxu0
    %150 = vmatprep.mubr.bf16.mxu0 0
    %151 = vmatmul.mubr.bf16.gmra.mrb[0].mxu0 %v92
    %v152 = vpop.f32.mrb[0].mxu0
    %v153 = vadd.f32 %v53, %v152
    %v154 = vpop.f32.mrb[0].mxu0
    %v155 = vpop.f32.mrb[0].mxu0
    %v156 = vadd.f32 %v53, %v155
    %v157 = vpop.f32.mrb[0].mxu0
    %158 = vdwg.mxu0
    %159 = vst [vmem:[#allocation3] sm:$0xff] %v129
    %160 = vst [vmem:[#allocation3 + $0x8] sm:$0xff] %v132
    %161 = vst [vmem:[#allocation3 + $0x10] sm:$0xff] %v137
    %162 = vst [vmem:[#allocation3 + $0x18] sm:$0xff] %v140
    %163 = vst [vmem:[#allocation3 + $0x20] sm:$0xff] %v145
    %164 = vst [vmem:[#allocation3 + $0x28] sm:$0xff] %v148
    %165 = vst [vmem:[#allocation3 + $0x30] sm:$0xff] %v153
    %166 = vst [vmem:[#allocation3 + $0x38] sm:$0xff] %v156
    %v167 = vld [vmem:[#allocation2] sm:$0xff]
    %v168 = vpack.c.bf16 %v167, %v167
    %v169 = vld [vmem:[#allocation4] sm:$0xf]
    %v170 = vld [vmem:[#allocation4 + $0x4] sm:$0xf]
    %v171 = vld [vmem:[#allocation4 + $0x8] sm:$0xf]
    %v172 = vld [vmem:[#allocation4 + $0xc] sm:$0xf]
    %v173 = vld [vmem:[#allocation4 + $0x10] sm:$0xf]
    %v174 = vld [vmem:[#allocation4 + $0x14] sm:$0xf]
    %v175 = vld [vmem:[#allocation4 + $0x18] sm:$0xf]
    %v176 = vld [vmem:[#allocation4 + $0x1c] sm:$0xf]
    %v177 = vld [vmem:[#allocation4 + $0x20] sm:$0xf]
    %v178 = vld [vmem:[#allocation4 + $0x24] sm:$0xf]
    %v179 = vld [vmem:[#allocation4 + $0x28] sm:$0xf]
    %v180 = vld [vmem:[#allocation4 + $0x2c] sm:$0xf]
    %v181 = vld [vmem:[#allocation4 + $0x30] sm:$0xf]
    %v182 = vld [vmem:[#allocation4 + $0x34] sm:$0xf]
    %v183 = vld [vmem:[#allocation4 + $0x38] sm:$0xf]
    %v184 = vld [vmem:[#allocation4 + $0x3c] sm:$0xf]
    %v201 = vunpack.c.l.b16 %v169
    %v202 = vunpack.c.l.b16 %v170
    %v203 = vunpack.c.l.b16 %v171
    %v204 = vunpack.c.l.b16 %v172
    %v205 = vunpack.c.l.b16 %v173
    %v206 = vunpack.c.l.b16 %v174
    %v207 = vunpack.c.l.b16 %v175
    %v208 = vunpack.c.l.b16 %v176
    %v209 = vunpack.c.l.b16 %v177
    %v210 = vunpack.c.l.b16 %v178
    %v211 = vunpack.c.l.b16 %v179
    %v212 = vunpack.c.l.b16 %v180
    %v213 = vunpack.c.l.b16 %v181
    %v214 = vunpack.c.l.b16 %v182
    %v215 = vunpack.c.l.b16 %v183
    %v216 = vunpack.c.l.b16 %v184
    %v217 = vpack.c.b16 %v202, %v201
    %v218 = vpack.c.b16 %v204, %v203
    %v219 = vpack.c.b16 %v206, %v205
    %v220 = vpack.c.b16 %v208, %v207
    %v221 = vpack.c.b16 %v210, %v209
    %v222 = vpack.c.b16 %v212, %v211
    %v223 = vpack.c.b16 %v214, %v213
    %v224 = vpack.c.b16 %v216, %v215
    %233 = vmatprep.subr.bf16.mxu0 0
    %234 = vmatpush1.bf16.msra.mxu0 %v217
    %235 = vmatprep.subr.bf16.mxu0 0
    %236 = vmatpush1.bf16.msra.mxu0 %v218
    %237 = vmatprep.subr.bf16.mxu0 0
    %238 = vmatpush1.bf16.msra.mxu0 %v219
    %239 = vmatprep.subr.bf16.mxu0 0
    %240 = vmatpush1.bf16.msra.mxu0 %v220
    %241 = vmatprep.subr.bf16.mxu0 0
    %242 = vmatpush1.bf16.msra.mxu0 %v221
    %243 = vmatprep.subr.bf16.mxu0 0
    %244 = vmatpush1.bf16.msra.mxu0 %v222
    %245 = vmatprep.subr.bf16.mxu0 0
    %246 = vmatpush1.bf16.msra.mxu0 %v223
    %247 = vmatprep.subr.bf16.mxu0 0
    %248 = vmatpush1.bf16.msra.mxu0 %v224
    %249 = vmatprep.subr.bf16.mxu0 0
    %250 = vmatpush1.bf16.msra.mxu0 0
    %251 = vmatprep.subr.bf16.mxu0 0
    %252 = vmatpush1.bf16.msra.mxu0 0
    %253 = vmatprep.subr.bf16.mxu0 0
    %254 = vmatpush1.bf16.msra.mxu0 0
    %255 = vmatprep.subr.bf16.mxu0 0
    %256 = vmatpush1.bf16.msra.mxu0 0
    %257 = vmatprep.subr.bf16.mxu0 0
    %258 = vmatpush1.bf16.msra.mxu0 0
    %259 = vmatprep.subr.bf16.mxu0 0
    %260 = vmatpush1.bf16.msra.mxu0 0
    %261 = vmatprep.subr.bf16.mxu0 0
    %262 = vmatpush1.bf16.msra.mxu0 0
    %263 = vmatprep.subr.bf16.mxu0 0
    %264 = vmatpush1.bf16.msra.mxu0 0
    %265 = vmatprep.mubr.bf16.mxu0 0
    %266 = vmatmul.mubr.bf16.gmra.mrb[0].mxu0 %v168
    %v267 = vpop.f32.mrb[0].mxu0
    %v268 = vadd.f32 0.0, %v267
    %v269 = vpop.f32.mrb[0].mxu0
    %v270 = vpop.f32.mrb[0].mxu0
    %v271 = vpop.f32.mrb[0].mxu0
    %272 = vdwg.mxu0
    %v273 = vld [vmem:[#allocation3] sm:$0xff]
    %v274 = vadd.f32 %v273, %v268
    %v275 = vtanh.pop %v274
    %276 = vst [vmem:[#allocation2] sm:$0xff] %v275
    %v277 = vpack.c.bf16 %v275, %v275
    %278 = vst [vmem:[#allocation7] sm:$0xf] %v277
    %v279 = vld [vmem:[#allocation2] sm:$0xff]
    %v280 = vpack.c.bf16 %v279, %v279
    %v281 = vld [vmem:[#allocation4] sm:$0xf]
    %v282 = vld [vmem:[#allocation4 + $0x4] sm:$0xf]
    %v283 = vld [vmem:[#allocation4 + $0x8] sm:$0xf]
    %v284 = vld [vmem:[#allocation4 + $0xc] sm:$0xf]
    %v285 = vld [vmem:[#allocation4 + $0x10] sm:$0xf]
    %v286 = vld [vmem:[#allocation4 + $0x14] sm:$0xf]
    %v287 = vld [vmem:[#allocation4 + $0x18] sm:$0xf]
    %v288 = vld [vmem:[#allocation4 + $0x1c] sm:$0xf]
    %v289 = vld [vmem:[#allocation4 + $0x20] sm:$0xf]
    %v290 = vld [vmem:[#allocation4 + $0x24] sm:$0xf]
    %v291 = vld [vmem:[#allocation4 + $0x28] sm:$0xf]
    %v292 = vld [vmem:[#allocation4 + $0x2c] sm:$0xf]
    %v293 = vld [vmem:[#allocation4 + $0x30] sm:$0xf]
    %v294 = vld [vmem:[#allocation4 + $0x34] sm:$0xf]
    %v295 = vld [vmem:[#allocation4 + $0x38] sm:$0xf]
    %v296 = vld [vmem:[#allocation4 + $0x3c] sm:$0xf]
    %v313 = vunpack.c.l.b16 %v281
    %v314 = vunpack.c.l.b16 %v282
    %v315 = vunpack.c.l.b16 %v283
    %v316 = vunpack.c.l.b16 %v284
    %v317 = vunpack.c.l.b16 %v285
    %v318 = vunpack.c.l.b16 %v286
    %v319 = vunpack.c.l.b16 %v287
    %v320 = vunpack.c.l.b16 %v288
    %v321 = vunpack.c.l.b16 %v289
    %v322 = vunpack.c.l.b16 %v290
    %v323 = vunpack.c.l.b16 %v291
    %v324 = vunpack.c.l.b16 %v292
    %v325 = vunpack.c.l.b16 %v293
    %v326 = vunpack.c.l.b16 %v294
    %v327 = vunpack.c.l.b16 %v295
    %v328 = vunpack.c.l.b16 %v296
    %v329 = vpack.c.b16 %v314, %v313
    %v330 = vpack.c.b16 %v316, %v315
    %v331 = vpack.c.b16 %v318, %v317
    %v332 = vpack.c.b16 %v320, %v319
    %v333 = vpack.c.b16 %v322, %v321
    %v334 = vpack.c.b16 %v324, %v323
    %v335 = vpack.c.b16 %v326, %v325
    %v336 = vpack.c.b16 %v328, %v327
    %345 = vmatprep.subr.bf16.mxu0 0
    %346 = vmatpush1.bf16.msra.mxu0 %v329
    %347 = vmatprep.subr.bf16.mxu0 0
    %348 = vmatpush1.bf16.msra.mxu0 %v330
    %349 = vmatprep.subr.bf16.mxu0 0
    %350 = vmatpush1.bf16.msra.mxu0 %v331
    %351 = vmatprep.subr.bf16.mxu0 0
    %352 = vmatpush1.bf16.msra.mxu0 %v332
    %353 = vmatprep.subr.bf16.mxu0 0
    %354 = vmatpush1.bf16.msra.mxu0 %v333
    %355 = vmatprep.subr.bf16.mxu0 0
    %356 = vmatpush1.bf16.msra.mxu0 %v334
    %357 = vmatprep.subr.bf16.mxu0 0
    %358 = vmatpush1.bf16.msra.mxu0 %v335
    %359 = vmatprep.subr.bf16.mxu0 0
    %360 = vmatpush1.bf16.msra.mxu0 %v336
    %361 = vmatprep.subr.bf16.mxu0 0
    %362 = vmatpush1.bf16.msra.mxu0 0
    %363 = vmatprep.subr.bf16.mxu0 0
    %364 = vmatpush1.bf16.msra.mxu0 0
    %365 = vmatprep.subr.bf16.mxu0 0
    %366 = vmatpush1.bf16.msra.mxu0 0
    %367 = vmatprep.subr.bf16.mxu0 0
    %368 = vmatpush1.bf16.msra.mxu0 0
    %369 = vmatprep.subr.bf16.mxu0 0
    %370 = vmatpush1.bf16.msra.mxu0 0
    %371 = vmatprep.subr.bf16.mxu0 0
    %372 = vmatpush1.bf16.msra.mxu0 0
    %373 = vmatprep.subr.bf16.mxu0 0
    %374 = vmatpush1.bf16.msra.mxu0 0
    %375 = vmatprep.subr.bf16.mxu0 0
    %376 = vmatpush1.bf16.msra.mxu0 0
    %377 = vmatprep.mubr.bf16.mxu0 0
    %378 = vmatmul.mubr.bf16.gmra.mrb[0].mxu0 %v280
    %v379 = vpop.f32.mrb[0].mxu0
    %v380 = vadd.f32 0.0, %v379
    %v381 = vpop.f32.mrb[0].mxu0
    %v382 = vpop.f32.mrb[0].mxu0
    %v383 = vpop.f32.mrb[0].mxu0
    %384 = vdwg.mxu0
    %s385 = scalar_lea.vmem [#allocation3], 8
    %v386 = vld [vmem:[%s385] sm:$0xff]
    %v387 = vadd.f32 %v386, %v380
    %v388 = vtanh.pop %v387
    %389 = vst [vmem:[#allocation2] sm:$0xff] %v388
    %v390 = vpack.c.bf16 %v388, %v388
    %s391 = scalar_lea.vmem [#allocation7], 4
    %392 = vst [vmem:[%s391] sm:$0xf] %v390
    %v393 = vld [vmem:[#allocation2] sm:$0xff]
    %v394 = vpack.c.bf16 %v393, %v393
    %v395 = vld [vmem:[#allocation4] sm:$0xf]
    %v396 = vld [vmem:[#allocation4 + $0x4] sm:$0xf]
    %v397 = vld [vmem:[#allocation4 + $0x8] sm:$0xf]
    %v398 = vld [vmem:[#allocation4 + $0xc] sm:$0xf]
    %v399 = vld [vmem:[#allocation4 + $0x10] sm:$0xf]
    %v400 = vld [vmem:[#allocation4 + $0x14] sm:$0xf]
    %v401 = vld [vmem:[#allocation4 + $0x18] sm:$0xf]
    %v402 = vld [vmem:[#allocation4 + $0x1c] sm:$0xf]
    %v403 = vld [vmem:[#allocation4 + $0x20] sm:$0xf]
    %v404 = vld [vmem:[#allocation4 + $0x24] sm:$0xf]
    %v405 = vld [vmem:[#allocation4 + $0x28] sm:$0xf]
    %v406 = vld [vmem:[#allocation4 + $0x2c] sm:$0xf]
    %v407 = vld [vmem:[#allocation4 + $0x30] sm:$0xf]
    %v408 = vld [vmem:[#allocation4 + $0x34] sm:$0xf]
    %v409 = vld [vmem:[#allocation4 + $0x38] sm:$0xf]
    %v410 = vld [vmem:[#allocation4 + $0x3c] sm:$0xf]
    %v427 = vunpack.c.l.b16 %v395
    %v428 = vunpack.c.l.b16 %v396
    %v429 = vunpack.c.l.b16 %v397
    %v430 = vunpack.c.l.b16 %v398
    %v431 = vunpack.c.l.b16 %v399
    %v432 = vunpack.c.l.b16 %v400
    %v433 = vunpack.c.l.b16 %v401
    %v434 = vunpack.c.l.b16 %v402
    %v435 = vunpack.c.l.b16 %v403
    %v436 = vunpack.c.l.b16 %v404
    %v437 = vunpack.c.l.b16 %v405
    %v438 = vunpack.c.l.b16 %v406
    %v439 = vunpack.c.l.b16 %v407
    %v440 = vunpack.c.l.b16 %v408
    %v441 = vunpack.c.l.b16 %v409
    %v442 = vunpack.c.l.b16 %v410
    %v443 = vpack.c.b16 %v428, %v427
    %v444 = vpack.c.b16 %v430, %v429
    %v445 = vpack.c.b16 %v432, %v431
    %v446 = vpack.c.b16 %v434, %v433
    %v447 = vpack.c.b16 %v436, %v435
    %v448 = vpack.c.b16 %v438, %v437
    %v449 = vpack.c.b16 %v440, %v439
    %v450 = vpack.c.b16 %v442, %v441
    %459 = vmatprep.subr.bf16.mxu0 0
    %460 = vmatpush1.bf16.msra.mxu0 %v443
    %461 = vmatprep.subr.bf16.mxu0 0
    %462 = vmatpush1.bf16.msra.mxu0 %v444
    %463 = vmatprep.subr.bf16.mxu0 0
    %464 = vmatpush1.bf16.msra.mxu0 %v445
    %465 = vmatprep.subr.bf16.mxu0 0
    %466 = vmatpush1.bf16.msra.mxu0 %v446
    %467 = vmatprep.subr.bf16.mxu0 0
    %468 = vmatpush1.bf16.msra.mxu0 %v447
    %469 = vmatprep.subr.bf16.mxu0 0
    %470 = vmatpush1.bf16.msra.mxu0 %v448
    %471 = vmatprep.subr.bf16.mxu0 0
    %472 = vmatpush1.bf16.msra.mxu0 %v449
    %473 = vmatprep.subr.bf16.mxu0 0
    %474 = vmatpush1.bf16.msra.mxu0 %v450
    %475 = vmatprep.subr.bf16.mxu0 0
    %476 = vmatpush1.bf16.msra.mxu0 0
    %477 = vmatprep.subr.bf16.mxu0 0
    %478 = vmatpush1.bf16.msra.mxu0 0
    %479 = vmatprep.subr.bf16.mxu0 0
    %480 = vmatpush1.bf16.msra.mxu0 0
    %481 = vmatprep.subr.bf16.mxu0 0
    %482 = vmatpush1.bf16.msra.mxu0 0
    %483 = vmatprep.subr.bf16.mxu0 0
    %484 = vmatpush1.bf16.msra.mxu0 0
    %485 = vmatprep.subr.bf16.mxu0 0
    %486 = vmatpush1.bf16.msra.mxu0 0
    %487 = vmatprep.subr.bf16.mxu0 0
    %488 = vmatpush1.bf16.msra.mxu0 0
    %489 = vmatprep.subr.bf16.mxu0 0
    %490 = vmatpush1.bf16.msra.mxu0 0
    %491 = vmatprep.mubr.bf16.mxu0 0
    %492 = vmatmul.mubr.bf16.gmra.mrb[0].mxu0 %v394
    %v493 = vpop.f32.mrb[0].mxu0
    %v494 = vadd.f32 0.0, %v493
    %v495 = vpop.f32.mrb[0].mxu0
    %v496 = vpop.f32.mrb[0].mxu0
    %v497 = vpop.f32.mrb[0].mxu0
    %498 = vdwg.mxu0
    %s499 = scalar_lea.vmem [#allocation3], 16
    %v500 = vld [vmem:[%s499] sm:$0xff]
    %v501 = vadd.f32 %v500, %v494
    %v502 = vtanh.pop %v501
    %503 = vst [vmem:[#allocation2] sm:$0xff] %v502
    %v504 = vpack.c.bf16 %v502, %v502
    %s505 = scalar_lea.vmem [#allocation7], 8
    %506 = vst [vmem:[%s505] sm:$0xf] %v504
    %v507 = vld [vmem:[#allocation2] sm:$0xff]
    %v508 = vpack.c.bf16 %v507, %v507
    %v509 = vld [vmem:[#allocation4] sm:$0xf]
    %v510 = vld [vmem:[#allocation4 + $0x4] sm:$0xf]
    %v511 = vld [vmem:[#allocation4 + $0x8] sm:$0xf]
    %v512 = vld [vmem:[#allocation4 + $0xc] sm:$0xf]
    %v513 = vld [vmem:[#allocation4 + $0x10] sm:$0xf]
    %v514 = vld [vmem:[#allocation4 + $0x14] sm:$0xf]
    %v515 = vld [vmem:[#allocation4 + $0x18] sm:$0xf]
    %v516 = vld [vmem:[#allocation4 + $0x1c] sm:$0xf]
    %v517 = vld [vmem:[#allocation4 + $0x20] sm:$0xf]
    %v518 = vld [vmem:[#allocation4 + $0x24] sm:$0xf]
    %v519 = vld [vmem:[#allocation4 + $0x28] sm:$0xf]
    %v520 = vld [vmem:[#allocation4 + $0x2c] sm:$0xf]
    %v521 = vld [vmem:[#allocation4 + $0x30] sm:$0xf]
    %v522 = vld [vmem:[#allocation4 + $0x34] sm:$0xf]
    %v523 = vld [vmem:[#allocation4 + $0x38] sm:$0xf]
    %v524 = vld [vmem:[#allocation4 + $0x3c] sm:$0xf]
    %v541 = vunpack.c.l.b16 %v509
    %v542 = vunpack.c.l.b16 %v510
    %v543 = vunpack.c.l.b16 %v511
    %v544 = vunpack.c.l.b16 %v512
    %v545 = vunpack.c.l.b16 %v513
    %v546 = vunpack.c.l.b16 %v514
    %v547 = vunpack.c.l.b16 %v515
    %v548 = vunpack.c.l.b16 %v516
    %v549 = vunpack.c.l.b16 %v517
    %v550 = vunpack.c.l.b16 %v518
    %v551 = vunpack.c.l.b16 %v519
    %v552 = vunpack.c.l.b16 %v520
    %v553 = vunpack.c.l.b16 %v521
    %v554 = vunpack.c.l.b16 %v522
    %v555 = vunpack.c.l.b16 %v523
    %v556 = vunpack.c.l.b16 %v524
    %v557 = vpack.c.b16 %v542, %v541
    %v558 = vpack.c.b16 %v544, %v543
    %v559 = vpack.c.b16 %v546, %v545
    %v560 = vpack.c.b16 %v548, %v547
    %v561 = vpack.c.b16 %v550, %v549
    %v562 = vpack.c.b16 %v552, %v551
    %v563 = vpack.c.b16 %v554, %v553
    %v564 = vpack.c.b16 %v556, %v555
    %573 = vmatprep.subr.bf16.mxu0 0
    %574 = vmatpush1.bf16.msra.mxu0 %v557
    %575 = vmatprep.subr.bf16.mxu0 0
    %576 = vmatpush1.bf16.msra.mxu0 %v558
    %577 = vmatprep.subr.bf16.mxu0 0
    %578 = vmatpush1.bf16.msra.mxu0 %v559
    %579 = vmatprep.subr.bf16.mxu0 0
    %580 = vmatpush1.bf16.msra.mxu0 %v560
    %581 = vmatprep.subr.bf16.mxu0 0
    %582 = vmatpush1.bf16.msra.mxu0 %v561
    %583 = vmatprep.subr.bf16.mxu0 0
    %584 = vmatpush1.bf16.msra.mxu0 %v562
    %585 = vmatprep.subr.bf16.mxu0 0
    %586 = vmatpush1.bf16.msra.mxu0 %v563
    %587 = vmatprep.subr.bf16.mxu0 0
    %588 = vmatpush1.bf16.msra.mxu0 %v564
    %589 = vmatprep.subr.bf16.mxu0 0
    %590 = vmatpush1.bf16.msra.mxu0 0
    %591 = vmatprep.subr.bf16.mxu0 0
    %592 = vmatpush1.bf16.msra.mxu0 0
    %593 = vmatprep.subr.bf16.mxu0 0
    %594 = vmatpush1.bf16.msra.mxu0 0
    %595 = vmatprep.subr.bf16.mxu0 0
    %596 = vmatpush1.bf16.msra.mxu0 0
    %597 = vmatprep.subr.bf16.mxu0 0
    %598 = vmatpush1.bf16.msra.mxu0 0
    %599 = vmatprep.subr.bf16.mxu0 0
    %600 = vmatpush1.bf16.msra.mxu0 0
    %601 = vmatprep.subr.bf16.mxu0 0
    %602 = vmatpush1.bf16.msra.mxu0 0
    %603 = vmatprep.subr.bf16.mxu0 0
    %604 = vmatpush1.bf16.msra.mxu0 0
    %605 = vmatprep.mubr.bf16.mxu0 0
    %606 = vmatmul.mubr.bf16.gmra.mrb[0].mxu0 %v508
    %v607 = vpop.f32.mrb[0].mxu0
    %v608 = vadd.f32 0.0, %v607
    %v609 = vpop.f32.mrb[0].mxu0
    %v610 = vpop.f32.mrb[0].mxu0
    %v611 = vpop.f32.mrb[0].mxu0
    %612 = vdwg.mxu0
    %s613 = scalar_lea.vmem [#allocation3], 24
    %v614 = vld [vmem:[%s613] sm:$0xff]
    %v615 = vadd.f32 %v614, %v608
    %v616 = vtanh.pop %v615
    %617 = vst [vmem:[#allocation2] sm:$0xff] %v616
    %v618 = vpack.c.bf16 %v616, %v616
    %s619 = scalar_lea.vmem [#allocation7], 12
    %620 = vst [vmem:[%s619] sm:$0xf] %v618
    %v621 = vld [vmem:[#allocation2] sm:$0xff]
    %v622 = vpack.c.bf16 %v621, %v621
    %v623 = vld [vmem:[#allocation4] sm:$0xf]
    %v624 = vld [vmem:[#allocation4 + $0x4] sm:$0xf]
    %v625 = vld [vmem:[#allocation4 + $0x8] sm:$0xf]
    %v626 = vld [vmem:[#allocation4 + $0xc] sm:$0xf]
    %v627 = vld [vmem:[#allocation4 + $0x10] sm:$0xf]
    %v628 = vld [vmem:[#allocation4 + $0x14] sm:$0xf]
    %v629 = vld [vmem:[#allocation4 + $0x18] sm:$0xf]
    %v630 = vld [vmem:[#allocation4 + $0x1c] sm:$0xf]
    %v631 = vld [vmem:[#allocation4 + $0x20] sm:$0xf]
    %v632 = vld [vmem:[#allocation4 + $0x24] sm:$0xf]
    %v633 = vld [vmem:[#allocation4 + $0x28] sm:$0xf]
    %v634 = vld [vmem:[#allocation4 + $0x2c] sm:$0xf]
    %v635 = vld [vmem:[#allocation4 + $0x30] sm:$0xf]
    %v636 = vld [vmem:[#allocation4 + $0x34] sm:$0xf]
    %v637 = vld [vmem:[#allocation4 + $0x38] sm:$0xf]
    %v638 = vld [vmem:[#allocation4 + $0x3c] sm:$0xf]
    %v655 = vunpack.c.l.b16 %v623
    %v656 = vunpack.c.l.b16 %v624
    %v657 = vunpack.c.l.b16 %v625
    %v658 = vunpack.c.l.b16 %v626
    %v659 = vunpack.c.l.b16 %v627
    %v660 = vunpack.c.l.b16 %v628
    %v661 = vunpack.c.l.b16 %v629
    %v662 = vunpack.c.l.b16 %v630
    %v663 = vunpack.c.l.b16 %v631
    %v664 = vunpack.c.l.b16 %v632
    %v665 = vunpack.c.l.b16 %v633
    %v666 = vunpack.c.l.b16 %v634
    %v667 = vunpack.c.l.b16 %v635
    %v668 = vunpack.c.l.b16 %v636
    %v669 = vunpack.c.l.b16 %v637
    %v670 = vunpack.c.l.b16 %v638
    %v671 = vpack.c.b16 %v656, %v655
    %v672 = vpack.c.b16 %v658, %v657
    %v673 = vpack.c.b16 %v660, %v659
    %v674 = vpack.c.b16 %v662, %v661
    %v675 = vpack.c.b16 %v664, %v663
    %v676 = vpack.c.b16 %v666, %v665
    %v677 = vpack.c.b16 %v668, %v667
    %v678 = vpack.c.b16 %v670, %v669
    %687 = vmatprep.subr.bf16.mxu0 0
    %688 = vmatpush1.bf16.msra.mxu0 %v671
    %689 = vmatprep.subr.bf16.mxu0 0
    %690 = vmatpush1.bf16.msra.mxu0 %v672
    %691 = vmatprep.subr.bf16.mxu0 0
    %692 = vmatpush1.bf16.msra.mxu0 %v673
    %693 = vmatprep.subr.bf16.mxu0 0
    %694 = vmatpush1.bf16.msra.mxu0 %v674
    %695 = vmatprep.subr.bf16.mxu0 0
    %696 = vmatpush1.bf16.msra.mxu0 %v675
    %697 = vmatprep.subr.bf16.mxu0 0
    %698 = vmatpush1.bf16.msra.mxu0 %v676
    %699 = vmatprep.subr.bf16.mxu0 0
    %700 = vmatpush1.bf16.msra.mxu0 %v677
    %701 = vmatprep.subr.bf16.mxu0 0
    %702 = vmatpush1.bf16.msra.mxu0 %v678
    %703 = vmatprep.subr.bf16.mxu0 0
    %704 = vmatpush1.bf16.msra.mxu0 0
    %705 = vmatprep.subr.bf16.mxu0 0
    %706 = vmatpush1.bf16.msra.mxu0 0
    %707 = vmatprep.subr.bf16.mxu0 0
    %708 = vmatpush1.bf16.msra.mxu0 0
    %709 = vmatprep.subr.bf16.mxu0 0
    %710 = vmatpush1.bf16.msra.mxu0 0
    %711 = vmatprep.subr.bf16.mxu0 0
    %712 = vmatpush1.bf16.msra.mxu0 0
    %713 = vmatprep.subr.bf16.mxu0 0
    %714 = vmatpush1.bf16.msra.mxu0 0
    %715 = vmatprep.subr.bf16.mxu0 0
    %716 = vmatpush1.bf16.msra.mxu0 0
    %717 = vmatprep.subr.bf16.mxu0 0
    %718 = vmatpush1.bf16.msra.mxu0 0
    %719 = vmatprep.mubr.bf16.mxu0 0
    %720 = vmatmul.mubr.bf16.gmra.mrb[0].mxu0 %v622
    %v721 = vpop.f32.mrb[0].mxu0
    %v722 = vadd.f32 0.0, %v721
    %v723 = vpop.f32.mrb[0].mxu0
    %v724 = vpop.f32.mrb[0].mxu0
    %v725 = vpop.f32.mrb[0].mxu0
    %726 = vdwg.mxu0
    %s727 = scalar_lea.vmem [#allocation3], 32
    %v728 = vld [vmem:[%s727] sm:$0xff]
    %v729 = vadd.f32 %v728, %v722
    %v730 = vtanh.pop %v729
    %731 = vst [vmem:[#allocation2] sm:$0xff] %v730
    %v732 = vpack.c.bf16 %v730, %v730
    %s733 = scalar_lea.vmem [#allocation7], 16
    %734 = vst [vmem:[%s733] sm:$0xf] %v732
    %v735 = vld [vmem:[#allocation2] sm:$0xff]
    %v736 = vpack.c.bf16 %v735, %v735
    %v737 = vld [vmem:[#allocation4] sm:$0xf]
    %v738 = vld [vmem:[#allocation4 + $0x4] sm:$0xf]
    %v739 = vld [vmem:[#allocation4 + $0x8] sm:$0xf]
    %v740 = vld [vmem:[#allocation4 + $0xc] sm:$0xf]
    %v741 = vld [vmem:[#allocation4 + $0x10] sm:$0xf]
    %v742 = vld [vmem:[#allocation4 + $0x14] sm:$0xf]
    %v743 = vld [vmem:[#allocation4 + $0x18] sm:$0xf]
    %v744 = vld [vmem:[#allocation4 + $0x1c] sm:$0xf]
    %v745 = vld [vmem:[#allocation4 + $0x20] sm:$0xf]
    %v746 = vld [vmem:[#allocation4 + $0x24] sm:$0xf]
    %v747 = vld [vmem:[#allocation4 + $0x28] sm:$0xf]
    %v748 = vld [vmem:[#allocation4 + $0x2c] sm:$0xf]
    %v749 = vld [vmem:[#allocation4 + $0x30] sm:$0xf]
    %v750 = vld [vmem:[#allocation4 + $0x34] sm:$0xf]
    %v751 = vld [vmem:[#allocation4 + $0x38] sm:$0xf]
    %v752 = vld [vmem:[#allocation4 + $0x3c] sm:$0xf]
    %v769 = vunpack.c.l.b16 %v737
    %v770 = vunpack.c.l.b16 %v738
    %v771 = vunpack.c.l.b16 %v739
    %v772 = vunpack.c.l.b16 %v740
    %v773 = vunpack.c.l.b16 %v741
    %v774 = vunpack.c.l.b16 %v742
    %v775 = vunpack.c.l.b16 %v743
    %v776 = vunpack.c.l.b16 %v744
    %v777 = vunpack.c.l.b16 %v745
    %v778 = vunpack.c.l.b16 %v746
    %v779 = vunpack.c.l.b16 %v747
    %v780 = vunpack.c.l.b16 %v748
    %v781 = vunpack.c.l.b16 %v749
    %v782 = vunpack.c.l.b16 %v750
    %v783 = vunpack.c.l.b16 %v751
    %v784 = vunpack.c.l.b16 %v752
    %v785 = vpack.c.b16 %v770, %v769
    %v786 = vpack.c.b16 %v772, %v771
    %v787 = vpack.c.b16 %v774, %v773
    %v788 = vpack.c.b16 %v776, %v775
    %v789 = vpack.c.b16 %v778, %v777
    %v790 = vpack.c.b16 %v780, %v779
    %v791 = vpack.c.b16 %v782, %v781
    %v792 = vpack.c.b16 %v784, %v783
    %801 = vmatprep.subr.bf16.mxu0 0
    %802 = vmatpush1.bf16.msra.mxu0 %v785
    %803 = vmatprep.subr.bf16.mxu0 0
    %804 = vmatpush1.bf16.msra.mxu0 %v786
    %805 = vmatprep.subr.bf16.mxu0 0
    %806 = vmatpush1.bf16.msra.mxu0 %v787
    %807 = vmatprep.subr.bf16.mxu0 0
    %808 = vmatpush1.bf16.msra.mxu0 %v788
    %809 = vmatprep.subr.bf16.mxu0 0
    %810 = vmatpush1.bf16.msra.mxu0 %v789
    %811 = vmatprep.subr.bf16.mxu0 0
    %812 = vmatpush1.bf16.msra.mxu0 %v790
    %813 = vmatprep.subr.bf16.mxu0 0
    %814 = vmatpush1.bf16.msra.mxu0 %v791
    %815 = vmatprep.subr.bf16.mxu0 0
    %816 = vmatpush1.bf16.msra.mxu0 %v792
    %817 = vmatprep.subr.bf16.mxu0 0
    %818 = vmatpush1.bf16.msra.mxu0 0
    %819 = vmatprep.subr.bf16.mxu0 0
    %820 = vmatpush1.bf16.msra.mxu0 0
    %821 = vmatprep.subr.bf16.mxu0 0
    %822 = vmatpush1.bf16.msra.mxu0 0
    %823 = vmatprep.subr.bf16.mxu0 0
    %824 = vmatpush1.bf16.msra.mxu0 0
    %825 = vmatprep.subr.bf16.mxu0 0
    %826 = vmatpush1.bf16.msra.mxu0 0
    %827 = vmatprep.subr.bf16.mxu0 0
    %828 = vmatpush1.bf16.msra.mxu0 0
    %829 = vmatprep.subr.bf16.mxu0 0
    %830 = vmatpush1.bf16.msra.mxu0 0
    %831 = vmatprep.subr.bf16.mxu0 0
    %832 = vmatpush1.bf16.msra.mxu0 0
    %833 = vmatprep.mubr.bf16.mxu0 0
    %834 = vmatmul.mubr.bf16.gmra.mrb[0].mxu0 %v736
    %v835 = vpop.f32.mrb[0].mxu0
    %v836 = vadd.f32 0.0, %v835
    %v837 = vpop.f32.mrb[0].mxu0
    %v838 = vpop.f32.mrb[0].mxu0
    %v839 = vpop.f32.mrb[0].mxu0
    %840 = vdwg.mxu0
    %s841 = scalar_lea.vmem [#allocation3], 40
    %v842 = vld [vmem:[%s841] sm:$0xff]
    %v843 = vadd.f32 %v842, %v836
    %v844 = vtanh.pop %v843
    %845 = vst [vmem:[#allocation2] sm:$0xff] %v844
    %v846 = vpack.c.bf16 %v844, %v844
    %s847 = scalar_lea.vmem [#allocation7], 20
    %848 = vst [vmem:[%s847] sm:$0xf] %v846
    %v849 = vld [vmem:[#allocation2] sm:$0xff]
    %v850 = vpack.c.bf16 %v849, %v849
    %v851 = vld [vmem:[#allocation4] sm:$0xf]
    %v852 = vld [vmem:[#allocation4 + $0x4] sm:$0xf]
    %v853 = vld [vmem:[#allocation4 + $0x8] sm:$0xf]
    %v854 = vld [vmem:[#allocation4 + $0xc] sm:$0xf]
    %v855 = vld [vmem:[#allocation4 + $0x10] sm:$0xf]
    %v856 = vld [vmem:[#allocation4 + $0x14] sm:$0xf]
    %v857 = vld [vmem:[#allocation4 + $0x18] sm:$0xf]
    %v858 = vld [vmem:[#allocation4 + $0x1c] sm:$0xf]
    %v859 = vld [vmem:[#allocation4 + $0x20] sm:$0xf]
    %v860 = vld [vmem:[#allocation4 + $0x24] sm:$0xf]
    %v861 = vld [vmem:[#allocation4 + $0x28] sm:$0xf]
    %v862 = vld [vmem:[#allocation4 + $0x2c] sm:$0xf]
    %v863 = vld [vmem:[#allocation4 + $0x30] sm:$0xf]
    %v864 = vld [vmem:[#allocation4 + $0x34] sm:$0xf]
    %v865 = vld [vmem:[#allocation4 + $0x38] sm:$0xf]
    %v866 = vld [vmem:[#allocation4 + $0x3c] sm:$0xf]
    %v883 = vunpack.c.l.b16 %v851
    %v884 = vunpack.c.l.b16 %v852
    %v885 = vunpack.c.l.b16 %v853
    %v886 = vunpack.c.l.b16 %v854
    %v887 = vunpack.c.l.b16 %v855
    %v888 = vunpack.c.l.b16 %v856
    %v889 = vunpack.c.l.b16 %v857
    %v890 = vunpack.c.l.b16 %v858
    %v891 = vunpack.c.l.b16 %v859
    %v892 = vunpack.c.l.b16 %v860
    %v893 = vunpack.c.l.b16 %v861
    %v894 = vunpack.c.l.b16 %v862
    %v895 = vunpack.c.l.b16 %v863
    %v896 = vunpack.c.l.b16 %v864
    %v897 = vunpack.c.l.b16 %v865
    %v898 = vunpack.c.l.b16 %v866
    %v899 = vpack.c.b16 %v884, %v883
    %v900 = vpack.c.b16 %v886, %v885
    %v901 = vpack.c.b16 %v888, %v887
    %v902 = vpack.c.b16 %v890, %v889
    %v903 = vpack.c.b16 %v892, %v891
    %v904 = vpack.c.b16 %v894, %v893
    %v905 = vpack.c.b16 %v896, %v895
    %v906 = vpack.c.b16 %v898, %v897
    %915 = vmatprep.subr.bf16.mxu0 0
    %916 = vmatpush1.bf16.msra.mxu0 %v899
    %917 = vmatprep.subr.bf16.mxu0 0
    %918 = vmatpush1.bf16.msra.mxu0 %v900
    %919 = vmatprep.subr.bf16.mxu0 0
    %920 = vmatpush1.bf16.msra.mxu0 %v901
    %921 = vmatprep.subr.bf16.mxu0 0
    %922 = vmatpush1.bf16.msra.mxu0 %v902
    %923 = vmatprep.subr.bf16.mxu0 0
    %924 = vmatpush1.bf16.msra.mxu0 %v903
    %925 = vmatprep.subr.bf16.mxu0 0
    %926 = vmatpush1.bf16.msra.mxu0 %v904
    %927 = vmatprep.subr.bf16.mxu0 0
    %928 = vmatpush1.bf16.msra.mxu0 %v905
    %929 = vmatprep.subr.bf16.mxu0 0
    %930 = vmatpush1.bf16.msra.mxu0 %v906
    %931 = vmatprep.subr.bf16.mxu0 0
    %932 = vmatpush1.bf16.msra.mxu0 0
    %933 = vmatprep.subr.bf16.mxu0 0
    %934 = vmatpush1.bf16.msra.mxu0 0
    %935 = vmatprep.subr.bf16.mxu0 0
    %936 = vmatpush1.bf16.msra.mxu0 0
    %937 = vmatprep.subr.bf16.mxu0 0
    %938 = vmatpush1.bf16.msra.mxu0 0
    %939 = vmatprep.subr.bf16.mxu0 0
    %940 = vmatpush1.bf16.msra.mxu0 0
    %941 = vmatprep.subr.bf16.mxu0 0
    %942 = vmatpush1.bf16.msra.mxu0 0
    %943 = vmatprep.subr.bf16.mxu0 0
    %944 = vmatpush1.bf16.msra.mxu0 0
    %945 = vmatprep.subr.bf16.mxu0 0
    %946 = vmatpush1.bf16.msra.mxu0 0
    %947 = vmatprep.mubr.bf16.mxu0 0
    %948 = vmatmul.mubr.bf16.gmra.mrb[0].mxu0 %v850
    %v949 = vpop.f32.mrb[0].mxu0
    %v950 = vadd.f32 0.0, %v949
    %v951 = vpop.f32.mrb[0].mxu0
    %v952 = vpop.f32.mrb[0].mxu0
    %v953 = vpop.f32.mrb[0].mxu0
    %954 = vdwg.mxu0
    %s955 = scalar_lea.vmem [#allocation3], 48
    %v956 = vld [vmem:[%s955] sm:$0xff]
    %v957 = vadd.f32 %v956, %v950
    %v958 = vtanh.pop %v957
    %959 = vst [vmem:[#allocation2] sm:$0xff] %v958
    %v960 = vpack.c.bf16 %v958, %v958
    %s961 = scalar_lea.vmem [#allocation7], 24
    %962 = vst [vmem:[%s961] sm:$0xf] %v960
    %v963 = vld [vmem:[#allocation2] sm:$0xff]
    %v964 = vpack.c.bf16 %v963, %v963
    %v965 = vld [vmem:[#allocation4] sm:$0xf]
    %v966 = vld [vmem:[#allocation4 + $0x4] sm:$0xf]
    %v967 = vld [vmem:[#allocation4 + $0x8] sm:$0xf]
    %v968 = vld [vmem:[#allocation4 + $0xc] sm:$0xf]
    %v969 = vld [vmem:[#allocation4 + $0x10] sm:$0xf]
    %v970 = vld [vmem:[#allocation4 + $0x14] sm:$0xf]
    %v971 = vld [vmem:[#allocation4 + $0x18] sm:$0xf]
    %v972 = vld [vmem:[#allocation4 + $0x1c] sm:$0xf]
    %v973 = vld [vmem:[#allocation4 + $0x20] sm:$0xf]
    %v974 = vld [vmem:[#allocation4 + $0x24] sm:$0xf]
    %v975 = vld [vmem:[#allocation4 + $0x28] sm:$0xf]
    %v976 = vld [vmem:[#allocation4 + $0x2c] sm:$0xf]
    %v977 = vld [vmem:[#allocation4 + $0x30] sm:$0xf]
    %v978 = vld [vmem:[#allocation4 + $0x34] sm:$0xf]
    %v979 = vld [vmem:[#allocation4 + $0x38] sm:$0xf]
    %v980 = vld [vmem:[#allocation4 + $0x3c] sm:$0xf]
    %v997 = vunpack.c.l.b16 %v965
    %v998 = vunpack.c.l.b16 %v966
    %v999 = vunpack.c.l.b16 %v967
    %v1000 = vunpack.c.l.b16 %v968
    %v1001 = vunpack.c.l.b16 %v969
    %v1002 = vunpack.c.l.b16 %v970
    %v1003 = vunpack.c.l.b16 %v971
    %v1004 = vunpack.c.l.b16 %v972
    %v1005 = vunpack.c.l.b16 %v973
    %v1006 = vunpack.c.l.b16 %v974
    %v1007 = vunpack.c.l.b16 %v975
    %v1008 = vunpack.c.l.b16 %v976
    %v1009 = vunpack.c.l.b16 %v977
    %v1010 = vunpack.c.l.b16 %v978
    %v1011 = vunpack.c.l.b16 %v979
    %v1012 = vunpack.c.l.b16 %v980
    %v1013 = vpack.c.b16 %v998, %v997
    %v1014 = vpack.c.b16 %v1000, %v999
    %v1015 = vpack.c.b16 %v1002, %v1001
    %v1016 = vpack.c.b16 %v1004, %v1003
    %v1017 = vpack.c.b16 %v1006, %v1005
    %v1018 = vpack.c.b16 %v1008, %v1007
    %v1019 = vpack.c.b16 %v1010, %v1009
    %v1020 = vpack.c.b16 %v1012, %v1011
    %1029 = vmatprep.subr.bf16.mxu0 0
    %1030 = vmatpush1.bf16.msra.mxu0 %v1013
    %1031 = vmatprep.subr.bf16.mxu0 0
    %1032 = vmatpush1.bf16.msra.mxu0 %v1014
    %1033 = vmatprep.subr.bf16.mxu0 0
    %1034 = vmatpush1.bf16.msra.mxu0 %v1015
    %1035 = vmatprep.subr.bf16.mxu0 0
    %1036 = vmatpush1.bf16.msra.mxu0 %v1016
    %1037 = vmatprep.subr.bf16.mxu0 0
    %1038 = vmatpush1.bf16.msra.mxu0 %v1017
    %1039 = vmatprep.subr.bf16.mxu0 0
    %1040 = vmatpush1.bf16.msra.mxu0 %v1018
    %1041 = vmatprep.subr.bf16.mxu0 0
    %1042 = vmatpush1.bf16.msra.mxu0 %v1019
    %1043 = vmatprep.subr.bf16.mxu0 0
    %1044 = vmatpush1.bf16.msra.mxu0 %v1020
    %1045 = vmatprep.subr.bf16.mxu0 0
    %1046 = vmatpush1.bf16.msra.mxu0 0
    %1047 = vmatprep.subr.bf16.mxu0 0
    %1048 = vmatpush1.bf16.msra.mxu0 0
    %1049 = vmatprep.subr.bf16.mxu0 0
    %1050 = vmatpush1.bf16.msra.mxu0 0
    %1051 = vmatprep.subr.bf16.mxu0 0
    %1052 = vmatpush1.bf16.msra.mxu0 0
    %1053 = vmatprep.subr.bf16.mxu0 0
    %1054 = vmatpush1.bf16.msra.mxu0 0
    %1055 = vmatprep.subr.bf16.mxu0 0
    %1056 = vmatpush1.bf16.msra.mxu0 0
    %1057 = vmatprep.subr.bf16.mxu0 0
    %1058 = vmatpush1.bf16.msra.mxu0 0
    %1059 = vmatprep.subr.bf16.mxu0 0
    %1060 = vmatpush1.bf16.msra.mxu0 0
    %1061 = vmatprep.mubr.bf16.mxu0 0
    %1062 = vmatmul.mubr.bf16.gmra.mrb[0].mxu0 %v964
    %v1063 = vpop.f32.mrb[0].mxu0
    %v1064 = vadd.f32 0.0, %v1063
    %v1065 = vpop.f32.mrb[0].mxu0
    %v1066 = vpop.f32.mrb[0].mxu0
    %v1067 = vpop.f32.mrb[0].mxu0
    %1068 = vdwg.mxu0
    %s1069 = scalar_lea.vmem [#allocation3], 56
    %v1070 = vld [vmem:[%s1069] sm:$0xff]
    %v1071 = vadd.f32 %v1070, %v1064
    %v1072 = vtanh.pop %v1071
    %1073 = vst [vmem:[#allocation2] sm:$0xff] %v1072
    %v1074 = vpack.c.bf16 %v1072, %v1072
    %s1075 = scalar_lea.vmem [#allocation7], 28
    %1076 = vst [vmem:[%s1075] sm:$0xf] %v1074
    // Predicated region
    $region26: #{tpu_custom_call.1} parent=1 // pred_check
      _
    $region27: #{tpu_custom_call.1} parent=1 // pred_check_branch
      %1078 = sbr.rel (0) target = $region29
    $region28: #{tpu_custom_call.1} parent=1 // pred_region
      %s1080 = ssub.s32 512, 512
      %1081 = vsyncadd [#allocation6], %s1080
      %s1082 = sshll.u32 [#allocation7], 4
      %s1083 = int_to_ptr.vmem [resolvable:$true] %s1082
      %1088 = dma.vmem_to_hbm [thread:$0]  %s1083, 512, %s4, [#allocation6], 64, 64, 4
    $region29: #{tpu_custom_call.1} parent=1 // pred_fallthru
      _
    // Predicated region
    $region30: #{tpu_custom_call.1} parent=1 // pred_check
      _
    $region31: #{tpu_custom_call.1} parent=1 // pred_check_branch
      %1090 = sbr.rel (0) target = $region33
    $region32: #{tpu_custom_call.1} parent=1 // pred_region
      %1091 = dma.done [#allocation6], 512
    $region33: #{tpu_custom_call.1} parent=1 // pred_fallthru
      _
    %1092 = vsyncpa [#allocation5], 1
    %1093 = vsyncpa [#allocation6], 1

</llo_original>
